<compile_context>
chip_gen: v7x
topology: tpu7x:2x2x1
jax: 0.10.0
libtpu: 0.0.40
codegen_flags: <defaults>
</compile_context>

<pallas_src>
import jax
import jax.numpy as jnp
from jax.experimental import pallas as pl
from jax.experimental.pallas import tpu as pltpu

LN_EPS = 1e-5                    # PyTorch nn.LayerNorm default
NEG_INF = -1e30                  # bias for padded px logits (vanishes under softmax)
VMEM_LIMIT = 48 * 1024 * 1024    # scoped-VMEM budget (safe on v7x's 64 MiB)
ACT_RESIDENT_BYTES = 8 * 1024 * 1024   # keep bf16 activation slab VMEM-resident below this


def _round_up(x, m):
    return ((x + m - 1) // m) * m


# ------------------------- in-kernel building blocks -------------------------

def _linear(x, w_ref, b_ref):
    # bf16 operands on the MXU, f32 accumulation.
    return jnp.dot(x.astype(jnp.bfloat16), w_ref[...],
                   preferred_element_type=jnp.float32) + b_ref[...]


def _layer_norm(x, g_ref, b_ref):
    # NOTE: single-pass E[x^2]-E[x]^2 variance in f32 (matches the JAX reference
    # below; PyTorch uses a two-pass form — difference is at tolerance level).
    mu = jnp.mean(x, axis=-1, keepdims=True)
    var = jnp.mean(x * x, axis=-1, keepdims=True) - mu * mu
    return (x - mu) * jax.lax.rsqrt(var + LN_EPS) * g_ref[...] + b_ref[...]


def _full_block(x, w_ref, b_ref, g_ref, be_ref):
    # full_block = Linear -> LayerNorm -> ReLU -> Dropout
    # TODO(synk): Dropout (p=0.05) omitted — eval-mode forward (training dropout is stochastic).
    return jnp.maximum(_layer_norm(_linear(x, w_ref, b_ref), g_ref, be_ref), 0.0)


# ------------------------------ parameter packing -----------------------------

def _interleave(p, q, t):
    """Pack two [..., Gp] arrays into [..., 2*Gp] as per-tile [p_tile_j | q_tile_j]
    so a single DMA / single matmul serves both decoder branches."""
    lead = p.shape[:-1]
    n = p.shape[-1] // t
    s = jnp.stack([p.reshape(lead + (n, t)), q.reshape(lead + (n, t))], axis=-2)
    return s.reshape(lead + (2 * p.shape[-1],))


def _pack_backbone(params, in_pad):
    bf = jnp.bfloat16
    d0w, d0b, d0g, d0be = params["d0"]
    d1w, d1b, d1g, d1be = params["d1"]
    d0w = jnp.pad(d0w, ((0, in_pad - d0w.shape[0]), (0, 0))).astype(bf)
    row = lambda v: v.reshape(1, -1).astype(jnp.float32)
    return (d0w, row(d0b), row(d0g), row(d0be),
            d1w.astype(bf), row(d1b), row(d1g), row(d1be))


def _pack_gene_params(params, g_pad, tile):
    bf = jnp.bfloat16

    def padlast(a, value=0.0):
        return jnp.pad(a, [(0, 0)] * (a.ndim - 1) + [(0, g_pad - a.shape[-1])],
                       constant_values=value)

    pw1, pb1, pg, pbe, pw2, pb2 = params["px"]
    qw1, qb1, qg, qbe, qw2, qb2 = params["pd"]

    # fused first projection (both branches share the same input h)
    w1_packed = _interleave(padlast(pw1), padlast(qw1), tile).astype(bf)
    b1_packed = _interleave(padlast(pb1)[None], padlast(qb1)[None], tile)
    g_packed = _interleave(padlast(pg)[None], padlast(qg)[None], tile)
    be_packed = _interleave(padlast(pbe)[None], padlast(qbe)[None], tile)

    def pad2(w):
        return jnp.pad(w, ((0, g_pad - w.shape[0]), (0, g_pad - w.shape[1])))

    # big Linear(n_genes, n_genes) weights, stacked on a leading branch axis, bf16
    w2_stack = jnp.stack([pad2(pw2), pad2(qw2)], axis=0).astype(bf)
    # padded px logits get a -1e30 bias so they vanish under softmax
    b2_stack = jnp.stack([padlast(pb2, NEG_INF), padlast(qb2, 0.0)], axis=0)[:, None, :]
    return w1_packed, b1_packed, g_packed, be_packed, w2_stack, b2_stack


# ------------------------------ parameter init --------------------------------

def init_params(key, uce_dim, cat_dim, layer_sizes, n_genes):
    """Synthetic parameters matching the PyTorch module's shapes (weights stored
    as [in, out] so the kernel computes x @ W + b)."""
    assert len(layer_sizes) == 2, "kernel below is written for two decoder blocks"
    in_dim = uce_dim + (cat_dim or 0)
    dims = [in_dim] + list(layer_sizes)
    keys = iter(jax.random.split(key, 16))

    def lin_init(k, fin, fout):
        k1, k2 = jax.random.split(k)
        bound = 1.0 / (fin ** 0.5)
        w = jax.random.uniform(k1, (fin, fout), jnp.float32, -bound, bound)
        b = jax.random.uniform(k2, (fout,), jnp.float32, -bound, bound)
        return w, b

    def ln_init(k, f):
        k1, k2 = jax.random.split(k)
        return (1.0 + 0.1 * jax.random.normal(k1, (f,), jnp.float32),
                0.1 * jax.random.normal(k2, (f,), jnp.float32))

    def block_init(k, fin, fout):
        k1, k2 = jax.random.split(k)
        w, b = lin_init(k1, fin, fout)
        g, be = ln_init(k2, fout)
        return (w, b, g, be)

    params = {
        "d0": block_init(next(keys), dims[0], dims[1]),
        "d1": block_init(next(keys), dims[1], dims[2]),
    }
    last = dims[-1]
    for name in ("px", "pd"):
        k1, k2, k3 = jax.random.split(next(keys), 3)
        w1, b1 = lin_init(k1, last, n_genes)
        g, be = ln_init(k2, n_genes)
        w2, b2 = lin_init(k3, n_genes, n_genes)
        params[name] = (w1, b1, g, be, w2, b2)
    params["px_rs"] = jax.random.normal(next(keys), (n_genes,), jnp.float32)
    return params


# --------------------------------- forward ------------------------------------

def uce_decoder_forward(uce_embeds, categorical_labels, library_size, params,
                        cat_dim, n_genes, tile_k=128, tile_n=128):
    """Returns (px_rate, px_r, px_drop), like UCEDecoderModel.forward.
    tile_k: reduction/gene-input tile (also the branch-packing tile).
    tile_n: output/gene-out tile (decoupled; use 256/512 on v6e/v7x)."""
    f32 = jnp.float32
    bf16 = jnp.bfloat16
    assert tile_n % tile_k == 0, "output tile must be a multiple of the K tile"

    # ---- glue (plain JAX): one-hot concat + lane-dense padding ----
    if cat_dim is not None:
        onehot = jax.nn.one_hot(categorical_labels, cat_dim, dtype=f32)
        x = jnp.concatenate([uce_embeds.astype(f32), onehot], axis=-1)
    else:
        x = uce_embeds.astype(f32)

    B, in_dim = x.shape
    B_pad = _round_up(B, 16)            # bf16 sublane packing (use >=256 rows in prod)
    in_pad = _round_up(in_dim, 128)
    TK, TN = tile_k, tile_n
    g_pad = _round_up(n_genes, TN)
    n_k = g_pad // TK
    n_j = g_pad // TN
    L1 = params["d0"][0].shape[1]
    L2 = params["d1"][0].shape[1]
    G_real = n_genes

    x = jnp.pad(x, ((0, B_pad - B), (0, in_pad - in_dim)))
    lib_pad = jnp.pad(library_size.astype(f32), (0, B_pad - B), constant_values=1.0)

    back = _pack_backbone(params, in_pad)
    w1_p, b1_p, g_p, be_p, w2_s, b2_s = _pack_gene_params(params, g_pad, TK)

    # v6e-style activation residency, size-gated so it is also safe on v7x (64 MiB)
    act_resident = (B_pad * 2 * g_pad * 2) <= ACT_RESIDENT_BYTES

    # ------------------------------- kernels ----------------------------------
    def proj_kernel(x_ref, d0w, d0b, d0g, d0be, d1w, d1b, d1g, d1be,
                    w1_ref, b1_ref,
                    pre_ref, spx_ref, spd_ref, qpx_ref, qpd_ref, h_scr):
        j = pl.program_id(0)

        @pl.when(j == 0)
        def _init():
            h0 = _full_block(x_ref[...], d0w, d0b, d0g, d0be)
            h1 = _full_block(h0, d1w, d1b, d1g, d1be)
            h_scr[...] = h1.astype(bf16)        # cast ONCE; reused every tile
            spx_ref[...] = jnp.zeros_like(spx_ref)
            spd_ref[...] = jnp.zeros_like(spd_ref)
            qpx_ref[...] = jnp.zeros_like(qpx_ref)
            qpd_ref[...] = jnp.zeros_like(qpd_ref)

        # one fused matmul produces both branch pre-activations for this gene tile
        pre = (jnp.dot(h_scr[...], w1_ref[...],
                       preferred_element_type=jnp.float32) + b1_ref[...])
        pre_ref[...] = pre

        # masked LayerNorm statistics (exclude padded gene columns)
        col = j * TK + jax.lax.broadcasted_iota(jnp.int32, (1, TK), 1)
        valid = col < G_real
        p_px = jnp.where(valid, pre[:, :TK], 0.0)
        p_pd = jnp.where(valid, pre[:, TK:], 0.0)
        spx_ref[...] += jnp.sum(p_px, axis=-1, keepdims=True)
        spd_ref[...] += jnp.sum(p_pd, axis=-1, keepdims=True)
        qpx_ref[...] += jnp.sum(p_px * p_px, axis=-1, keepdims=True)
        qpd_ref[...] += jnp.sum(p_pd * p_pd, axis=-1, keepdims=True)

    def norm_kernel(pre_ref, spx_ref, spd_ref, qpx_ref, qpd_ref,
                    g_ref, be_ref, act_ref):
        # LayerNorm + ReLU applied ONCE per gene tile; result stored as bf16.
        inv_g = 1.0 / float(G_real)
        mu_px = spx_ref[...] * inv_g
        mu_pd = spd_ref[...] * inv_g
        rs_px = jax.lax.rsqrt(qpx_ref[...] * inv_g - mu_px * mu_px + LN_EPS)
        rs_pd = jax.lax.rsqrt(qpd_ref[...] * inv_g - mu_pd * mu_pd + LN_EPS)

        pre = pre_ref[...]
        gam = g_ref[...]
        bet = be_ref[...]
        # padded cols -> 0 because gamma/beta are zero-padded
        a_px = jnp.maximum((pre[:, :TK] - mu_px) * rs_px * gam[:, :TK] + bet[:, :TK], 0.0)
        a_pd = jnp.maximum((pre[:, TK:] - mu_pd) * rs_pd * gam[:, TK:] + bet[:, TK:], 0.0)
        act_ref[:, :TK] = a_px.astype(bf16)
        act_ref[:, TK:] = a_pd.astype(bf16)

    def gene_kernel(act_ref, w2_ref, b2_ref,
                    px_ref, pd_ref, m_ref, l_ref, acc_px, acc_pd):
        k = pl.program_id(1)
        nk = pl.num_programs(1)

        @pl.when(k == 0)
        def _zero():
            acc_px[...] = jnp.zeros_like(acc_px)
            acc_pd[...] = jnp.zeros_like(acc_pd)

        if act_resident:
            off = pl.multiple_of(k * (2 * TK), 2 * TK)
            a = act_ref[:, pl.ds(off, 2 * TK)]      # slice from VMEM-resident slab
        else:
            a = act_ref[...]                         # streamed bf16 K tile

        acc_px[...] += jnp.dot(a[:, :TK], w2_ref[0],
                               preferred_element_type=jnp.float32)
        acc_pd[...] += jnp.dot(a[:, TK:], w2_ref[1],
                               preferred_element_type=jnp.float32)

        @pl.when(k == nk - 1)
        def _finish():
            px = acc_px[...] + b2_ref[0]
            pd = acc_pd[...] + b2_ref[1]
            px_ref[...] = px
            pd_ref[...] = pd
            # online-softmax partials for this output tile (data already in VMEM)
            m = jnp.max(px, axis=-1, keepdims=True)
            m_ref[0] = m
            l_ref[0] = jnp.sum(jnp.exp(px - m), axis=-1, keepdims=True)

    def finalize_kernel(px_ref, m_ref, s_ref, rate_ref):
        # per-row scale = library_size / sum_exp already folded in plain JAX
        rate_ref[...] = jnp.exp(px_ref[...] - m_ref[...]) * s_ref[...]

    # ----------------------------- pallas calls --------------------------------
    const2 = lambda j: (0, 0)
    in_specs_a = [
        pl.BlockSpec((B_pad, in_pad), const2),
        pl.BlockSpec((in_pad, L1), const2),
        pl.BlockSpec((1, L1), const2),
        pl.BlockSpec((1, L1), const2),
        pl.BlockSpec((1, L1), const2),
        pl.BlockSpec((L1, L2), const2),
        pl.BlockSpec((1, L2), const2),
        pl.BlockSpec((1, L2), const2),
        pl.BlockSpec((1, L2), const2),
        pl.BlockSpec((L2, 2 * TK), lambda j: (0, j)),     # fused W1 tile (bf16)
        pl.BlockSpec((1, 2 * TK), lambda j: (0, j)),      # fused b1 tile
    ]
    out_specs_a = [
        pl.BlockSpec((B_pad, 2 * TK), lambda j: (0, j)),  # packed pre-activations
        pl.BlockSpec((B_pad, 1), const2),                 # LN sum   (px)
        pl.BlockSpec((B_pad, 1), const2),                 # LN sum   (pd)
        pl.BlockSpec((B_pad, 1), const2),                 # LN sumsq (px)
        pl.BlockSpec((B_pad, 1), const2),                 # LN sumsq (pd)
    ]
    ce_proj = pl.CostEstimate(
        flops=2 * B_pad * (in_pad * L1 + L1 * L2 + 2 * L2 * g_pad),
        transcendentals=4 * B_pad,
        bytes_accessed=(in_pad * L1 + L1 * L2 + 2 * L2 * g_pad) * 2
        + B_pad * in_pad * 4 + 2 * B_pad * g_pad * 4)

    preact, s_px, s_pd, q_px, q_pd = pl.pallas_call(
        proj_kernel,
        out_shape=(
            jax.ShapeDtypeStruct((B_pad, 2 * g_pad), f32),
            jax.ShapeDtypeStruct((B_pad, 1), f32),
            jax.ShapeDtypeStruct((B_pad, 1), f32),
            jax.ShapeDtypeStruct((B_pad, 1), f32),
            jax.ShapeDtypeStruct((B_pad, 1), f32),
        ),
        grid_spec=pltpu.PrefetchScalarGridSpec(
            num_scalar_prefetch=0,
            grid=(n_k,),
            in_specs=in_specs_a,
            out_specs=out_specs_a,
            scratch_shapes=[pltpu.VMEM((B_pad, L2), bf16)],   # backbone h, bf16
        ),
        compiler_params=pltpu.CompilerParams(
            dimension_semantics=("arbitrary",),
            vmem_limit_bytes=VMEM_LIMIT),
        cost_estimate=ce_proj,
    )(x, *back, w1_p, b1_p)

    act = pl.pallas_call(
        norm_kernel,
        out_shape=jax.ShapeDtypeStruct((B_pad, 2 * g_pad), bf16),
        grid=(n_k,),
        in_specs=[
            pl.BlockSpec((B_pad, 2 * TK), lambda j: (0, j)),
            pl.BlockSpec((B_pad, 1), lambda j: (0, 0)),
            pl.BlockSpec((B_pad, 1), lambda j: (0, 0)),
            pl.BlockSpec((B_pad, 1), lambda j: (0, 0)),
            pl.BlockSpec((B_pad, 1), lambda j: (0, 0)),
            pl.BlockSpec((1, 2 * TK), lambda j: (0, j)),      # gamma (packed)
            pl.BlockSpec((1, 2 * TK), lambda j: (0, j)),      # beta  (packed)
        ],
        out_specs=pl.BlockSpec((B_pad, 2 * TK), lambda j: (0, j)),
        compiler_params=pltpu.CompilerParams(
            dimension_semantics=("parallel",),
            vmem_limit_bytes=VMEM_LIMIT),
    )(preact, s_px, s_pd, q_px, q_pd, g_p, be_p)

    if act_resident:
        act_spec = pl.BlockSpec((B_pad, 2 * g_pad), lambda j, k: (0, 0))   # DMA once, stays resident
    else:
        act_spec = pl.BlockSpec((B_pad, 2 * TK), lambda j, k: (0, k))      # streamed bf16 K tile
    in_specs_c = [
        act_spec,
        pl.BlockSpec((2, TK, TN), lambda j, k: (0, k, j)),                 # stacked W2 tile (bf16)
        pl.BlockSpec((2, 1, TN), lambda j, k: (0, 0, j)),                  # stacked b2 tile
    ]
    out_specs_c = [
        pl.BlockSpec((B_pad, TN), lambda j, k: (0, j)),                    # px logits
        pl.BlockSpec((B_pad, TN), lambda j, k: (0, j)),                    # px_drop
        pl.BlockSpec((1, B_pad, 1), lambda j, k: (j, 0, 0)),               # per-tile softmax max
        pl.BlockSpec((1, B_pad, 1), lambda j, k: (j, 0, 0)),               # per-tile softmax sumexp
    ]
    ce_gene = pl.CostEstimate(
        flops=4 * B_pad * g_pad * g_pad,
        transcendentals=B_pad * g_pad,
        bytes_accessed=2 * g_pad * g_pad * 2
        + (1 if act_resident else n_j) * B_pad * 2 * g_pad * 2
        + 2 * B_pad * g_pad * 4)

    px_log, pd_full, m_part, l_part = pl.pallas_call(
        gene_kernel,
        out_shape=(
            jax.ShapeDtypeStruct((B_pad, g_pad), f32),
            jax.ShapeDtypeStruct((B_pad, g_pad), f32),
            jax.ShapeDtypeStruct((n_j, B_pad, 1), f32),
            jax.ShapeDtypeStruct((n_j, B_pad, 1), f32),
        ),
        grid_spec=pltpu.PrefetchScalarGridSpec(
            num_scalar_prefetch=0,
            grid=(n_j, n_k),
            in_specs=in_specs_c,
            out_specs=out_specs_c,
            scratch_shapes=[pltpu.VMEM((B_pad, TN), f32),
                            pltpu.VMEM((B_pad, TN), f32)],
        ),
        compiler_params=pltpu.CompilerParams(
            dimension_semantics=("parallel", "arbitrary"),     # j shards across TCs on v7x
            vmem_limit_bytes=VMEM_LIMIT),
        cost_estimate=ce_gene,
    )(act, w2_s, b2_s)

    # ---- cross-tile softmax combine + library scaling, hoisted to plain JAX ----
    m_all = m_part[:, :, 0]                               # (n_j, B_pad)
    l_all = l_part[:, :, 0]
    m_fin = jnp.max(m_all, axis=0)                        # (B_pad,)
    l_fin = jnp.sum(l_all * jnp.exp(m_all - m_fin[None, :]), axis=0)
    scale = lib_pad / l_fin                               # exact divide (not approx recip)
    m2d = m_fin.reshape(B_pad, 1)
    s2d = scale.reshape(B_pad, 1)

    rate_full = pl.pallas_call(
        finalize_kernel,
        out_shape=jax.ShapeDtypeStruct((B_pad, g_pad), f32),
        grid=(n_j,),
        in_specs=[
            pl.BlockSpec((B_pad, TN), lambda j: (0, j)),
            pl.BlockSpec((B_pad, 1), lambda j: (0, 0)),
            pl.BlockSpec((B_pad, 1), lambda j: (0, 0)),
        ],
        out_specs=pl.BlockSpec((B_pad, TN), lambda j: (0, j)),
        compiler_params=pltpu.CompilerParams(
            dimension_semantics=("parallel",)),
    )(px_log, m2d, s2d)

    px_rate = rate_full[:B, :n_genes]
    px_drop = pd_full[:B, :n_genes]
    px_r = jnp.exp(params["px_rs"])   # batch-independent -> plain JAX
    return px_rate, px_r, px_drop


# ----------------------------- pure-JAX reference ------------------------------

def _ref_forward(uce_embeds, categorical_labels, library_size, params, cat_dim):
    """Reference of the same (bf16-weight, f32-accumulate) math, natural shapes."""
    bf = jnp.bfloat16

    def lin(x, w, b):
        return jnp.dot(x.astype(bf), w.astype(bf),
                       preferred_element_type=jnp.float32) + b

    def ln(x, g, be):
        mu = jnp.mean(x, -1, keepdims=True)
        var = jnp.mean(x * x, -1, keepdims=True) - mu * mu
        return (x - mu) * jax.lax.rsqrt(var + LN_EPS) * g + be

    def fb(x, w, b, g, be):
        return jnp.maximum(ln(lin(x, w, b), g, be), 0.0)

    if cat_dim is not None:
        onehot = jax.nn.one_hot(categorical_labels, cat_dim, dtype=jnp.float32)
        x = jnp.concatenate([uce_embeds.astype(jnp.float32), onehot], -1)
    else:
        x = uce_embeds.astype(jnp.float32)

    h = fb(x, *params["d0"])
    h = fb(h, *params["d1"])

    pw1, pb1, pg, pbe, pw2, pb2 = params["px"]
    qw1, qb1, qg, qbe, qw2, qb2 = params["pd"]
    px = lin(fb(h, pw1, pb1, pg, pbe), pw2, pb2)
    pd = lin(fb(h, qw1, qb1, qg, qbe), qw2, qb2)

    px = px - jnp.max(px, -1, keepdims=True)
    e = jnp.exp(px)
    px_scale = e / jnp.sum(e, -1, keepdims=True)
    px_rate = library_size[:, None].astype(jnp.float32) * px_scale
    return px_rate, jnp.exp(params["px_rs"]), pd


# ----------------------------------- main ---------------------------------------

if __name__ == "__main__":
    B = 64                 # multiple of 16 (bf16 sublanes); use >=256 in production
    UCE_DIM = 128          # uce_embedding_size (small demo value)
    CAT_DIM = 4            # categorical_variable_dim
    LAYER_SIZES = (128, 128)
    N_GENES = 250          # deliberately NOT a multiple of 128: exercises padding/masking
    TILE_K = 128           # use 256 on v6e/v7x in production
    TILE_N = 128           # use 256/512 on v6e/v7x in production

    key = jax.random.PRNGKey(0)
    k_x, k_lab, k_lib, k_param = jax.random.split(key, 4)

    uce_embeds = jax.random.normal(k_x, (B, UCE_DIM), jnp.float32)
    categorical_labels = jax.random.randint(k_lab, (B,), 0, CAT_DIM)
    library_size = jax.random.uniform(k_lib, (B,), jnp.float32, 1.0, 100.0)
    params = init_params(k_param, UCE_DIM, CAT_DIM, LAYER_SIZES, N_GENES)

    px_rate, px_r, px_drop = uce_decoder_forward(
        uce_embeds, categorical_labels, library_size, params, CAT_DIM, N_GENES,
        tile_k=TILE_K, tile_n=TILE_N)
    jax.block_until_ready((px_rate, px_r, px_drop))

    # correctness check against a pure-JAX reference of the same math
    r_rate, r_r, r_drop = _ref_forward(
        uce_embeds, categorical_labels, library_size, params, CAT_DIM)

    assert px_rate.shape == (B, N_GENES)
    assert px_r.shape == (N_GENES,)
    assert px_drop.shape == (B, N_GENES)
    assert jnp.allclose(px_rate, r_rate, rtol=2e-3, atol=2e-3)
    assert jnp.allclose(px_drop, r_drop, rtol=2e-3, atol=2e-3)
    assert jnp.allclose(px_r, r_r, rtol=1e-5, atol=1e-6)

    print("KERNEL_OK")
</pallas_src>

<mosaic_0001>
module attributes {stable_mosaic.version = 11 : i64} {
  func.func @proj_kernel(%arg0: i32, %arg1: memref<64x256xf32, #tpu.memory_space<vmem>>, %arg2: memref<256x128xbf16, #tpu.memory_space<vmem>>, %arg3: memref<1x128xf32, #tpu.memory_space<vmem>>, %arg4: memref<1x128xf32, #tpu.memory_space<vmem>>, %arg5: memref<1x128xf32, #tpu.memory_space<vmem>>, %arg6: memref<128x128xbf16, #tpu.memory_space<vmem>>, %arg7: memref<1x128xf32, #tpu.memory_space<vmem>>, %arg8: memref<1x128xf32, #tpu.memory_space<vmem>>, %arg9: memref<1x128xf32, #tpu.memory_space<vmem>>, %arg10: memref<128x256xbf16, #tpu.memory_space<vmem>>, %arg11: memref<1x256xf32, #tpu.memory_space<vmem>>, %arg12: memref<64x256xf32, #tpu.memory_space<vmem>>, %arg13: memref<64x1xf32, #tpu.memory_space<vmem>>, %arg14: memref<64x1xf32, #tpu.memory_space<vmem>>, %arg15: memref<64x1xf32, #tpu.memory_space<vmem>>, %arg16: memref<64x1xf32, #tpu.memory_space<vmem>>, %arg17: memref<64x128xbf16, #tpu.memory_space<vmem>>) attributes {dimension_semantics = [#tpu.dimension_semantics<arbitrary>], iteration_bounds = array<i64: 2>, scalar_prefetch = 0 : i64, scratch_operands = 1 : i64, tpu.core_type = #tpu.core_type<tc>, window_params = [{pipeline_mode = #tpu.pipeline_mode<synchronous>, transform_indices = @transform_0, window_bounds = array<i64: 64, 256>}, {pipeline_mode = #tpu.pipeline_mode<synchronous>, transform_indices = @transform_1, window_bounds = array<i64: 256, 128>}, {pipeline_mode = #tpu.pipeline_mode<synchronous>, transform_indices = @transform_2, window_bounds = array<i64: 1, 128>}, {pipeline_mode = #tpu.pipeline_mode<synchronous>, transform_indices = @transform_3, window_bounds = array<i64: 1, 128>}, {pipeline_mode = #tpu.pipeline_mode<synchronous>, transform_indices = @transform_4, window_bounds = array<i64: 1, 128>}, {pipeline_mode = #tpu.pipeline_mode<synchronous>, transform_indices = @transform_5, window_bounds = array<i64: 128, 128>}, {pipeline_mode = #tpu.pipeline_mode<synchronous>, transform_indices = @transform_6, window_bounds = array<i64: 1, 128>}, {pipeline_mode = #tpu.pipeline_mode<synchronous>, transform_indices = @transform_7, window_bounds = array<i64: 1, 128>}, {pipeline_mode = #tpu.pipeline_mode<synchronous>, transform_indices = @transform_8, window_bounds = array<i64: 1, 128>}, {transform_indices = @transform_9, window_bounds = array<i64: 128, 256>}, {transform_indices = @transform_10, window_bounds = array<i64: 1, 256>}, {transform_indices = @transform_11, window_bounds = array<i64: 64, 256>}, {pipeline_mode = #tpu.pipeline_mode<synchronous>, transform_indices = @transform_12, window_bounds = array<i64: 64, 1>}, {pipeline_mode = #tpu.pipeline_mode<synchronous>, transform_indices = @transform_13, window_bounds = array<i64: 64, 1>}, {pipeline_mode = #tpu.pipeline_mode<synchronous>, transform_indices = @transform_14, window_bounds = array<i64: 64, 1>}, {pipeline_mode = #tpu.pipeline_mode<synchronous>, transform_indices = @transform_15, window_bounds = array<i64: 64, 1>}]} {
    %c0_i32 = arith.constant 0 : i32
    %0 = arith.cmpi eq, %arg0, %c0_i32 : i32
    %1 = arith.extui %0 : i1 to i32
    %c0_i32_0 = arith.constant 0 : i32
    %2 = arith.cmpi ne, %1, %c0_i32_0 : i32
    scf.if %2 {
      %c0_30 = arith.constant 0 : index
      %c0_31 = arith.constant 0 : index
      %48 = vector.load %arg1[%c0_30, %c0_31] : memref<64x256xf32, #tpu.memory_space<vmem>>, vector<64x256xf32>
      %49 = arith.truncf %48 : vector<64x256xf32> to vector<64x256xbf16>
      %c0_32 = arith.constant 0 : index
      %c0_33 = arith.constant 0 : index
      %50 = vector.load %arg2[%c0_32, %c0_33] : memref<256x128xbf16, #tpu.memory_space<vmem>>, vector<256x128xbf16>
      %cst_34 = arith.constant dense<0.000000e+00> : vector<64x128xf32>
      %51 = tpu.matmul %49, %50, %cst_34 {dimension_numbers = #tpu.dot_dimension_numbers<[1], [0], [0], [1], [0, 0, 1, 1], [], []>} : vector<64x256xbf16>, vector<256x128xbf16>, vector<64x128xf32> -> vector<64x128xf32>
      %c0_35 = arith.constant 0 : index
      %c0_36 = arith.constant 0 : index
      %52 = vector.load %arg3[%c0_35, %c0_36] : memref<1x128xf32, #tpu.memory_space<vmem>>, vector<1x128xf32>
      %53 = vector.broadcast %52 : vector<1x128xf32> to vector<64x128xf32>
      %54 = arith.addf %51, %53 : vector<64x128xf32>
      %cst_37 = arith.constant dense<0.000000e+00> : vector<64xf32>
      %55 = vector.multi_reduction <add>, %54, %cst_37 [1] : vector<64x128xf32> to vector<64xf32>
      %56 = vector.shape_cast %55 : vector<64xf32> to vector<64x1xf32>
      %cst_38 = arith.constant 1.280000e+02 : f32
      %57 = vector.broadcast %cst_38 : f32 to vector<64x1xf32>
      %58 = arith.divf %56, %57 : vector<64x1xf32>
      %59 = arith.mulf %54, %54 : vector<64x128xf32>
      %cst_39 = arith.constant dense<0.000000e+00> : vector<64xf32>
      %60 = vector.multi_reduction <add>, %59, %cst_39 [1] : vector<64x128xf32> to vector<64xf32>
      %61 = vector.shape_cast %60 : vector<64xf32> to vector<64x1xf32>
      %cst_40 = arith.constant 1.280000e+02 : f32
      %62 = vector.broadcast %cst_40 : f32 to vector<64x1xf32>
      %63 = arith.divf %61, %62 : vector<64x1xf32>
      %64 = arith.mulf %58, %58 : vector<64x1xf32>
      %65 = arith.subf %63, %64 : vector<64x1xf32>
      %66 = vector.broadcast %58 : vector<64x1xf32> to vector<64x128xf32>
      %67 = arith.subf %54, %66 : vector<64x128xf32>
      %cst_41 = arith.constant 9.99999974E-6 : f32
      %68 = vector.broadcast %cst_41 : f32 to vector<64x1xf32>
      %69 = arith.addf %65, %68 : vector<64x1xf32>
      %70 = math.rsqrt %69 : vector<64x1xf32>
      %71 = vector.broadcast %70 : vector<64x1xf32> to vector<64x128xf32>
      %72 = arith.mulf %67, %71 : vector<64x128xf32>
      %c0_42 = arith.constant 0 : index
      %c0_43 = arith.constant 0 : index
      %73 = vector.load %arg4[%c0_42, %c0_43] : memref<1x128xf32, #tpu.memory_space<vmem>>, vector<1x128xf32>
      %74 = vector.broadcast %73 : vector<1x128xf32> to vector<64x128xf32>
      %75 = arith.mulf %72, %74 : vector<64x128xf32>
      %c0_44 = arith.constant 0 : index
      %c0_45 = arith.constant 0 : index
      %76 = vector.load %arg5[%c0_44, %c0_45] : memref<1x128xf32, #tpu.memory_space<vmem>>, vector<1x128xf32>
      %77 = vector.broadcast %76 : vector<1x128xf32> to vector<64x128xf32>
      %78 = arith.addf %75, %77 : vector<64x128xf32>
      %cst_46 = arith.constant 0.000000e+00 : f32
      %79 = vector.broadcast %cst_46 : f32 to vector<64x128xf32>
      %80 = arith.maximumf %78, %79 : vector<64x128xf32>
      %81 = arith.truncf %80 : vector<64x128xf32> to vector<64x128xbf16>
      %c0_47 = arith.constant 0 : index
      %c0_48 = arith.constant 0 : index
      %82 = vector.load %arg6[%c0_47, %c0_48] : memref<128x128xbf16, #tpu.memory_space<vmem>>, vector<128x128xbf16>
      %cst_49 = arith.constant dense<0.000000e+00> : vector<64x128xf32>
      %83 = tpu.matmul %81, %82, %cst_49 {dimension_numbers = #tpu.dot_dimension_numbers<[1], [0], [0], [1], [0, 0, 1, 1], [], []>} : vector<64x128xbf16>, vector<128x128xbf16>, vector<64x128xf32> -> vector<64x128xf32>
      %c0_50 = arith.constant 0 : index
      %c0_51 = arith.constant 0 : index
      %84 = vector.load %arg7[%c0_50, %c0_51] : memref<1x128xf32, #tpu.memory_space<vmem>>, vector<1x128xf32>
      %85 = vector.broadcast %84 : vector<1x128xf32> to vector<64x128xf32>
      %86 = arith.addf %83, %85 : vector<64x128xf32>
      %cst_52 = arith.constant dense<0.000000e+00> : vector<64xf32>
      %87 = vector.multi_reduction <add>, %86, %cst_52 [1] : vector<64x128xf32> to vector<64xf32>
      %88 = vector.shape_cast %87 : vector<64xf32> to vector<64x1xf32>
      %cst_53 = arith.constant 1.280000e+02 : f32
      %89 = vector.broadcast %cst_53 : f32 to vector<64x1xf32>
      %90 = arith.divf %88, %89 : vector<64x1xf32>
      %91 = arith.mulf %86, %86 : vector<64x128xf32>
      %cst_54 = arith.constant dense<0.000000e+00> : vector<64xf32>
      %92 = vector.multi_reduction <add>, %91, %cst_54 [1] : vector<64x128xf32> to vector<64xf32>
      %93 = vector.shape_cast %92 : vector<64xf32> to vector<64x1xf32>
      %cst_55 = arith.constant 1.280000e+02 : f32
      %94 = vector.broadcast %cst_55 : f32 to vector<64x1xf32>
      %95 = arith.divf %93, %94 : vector<64x1xf32>
      %96 = arith.mulf %90, %90 : vector<64x1xf32>
      %97 = arith.subf %95, %96 : vector<64x1xf32>
      %98 = vector.broadcast %90 : vector<64x1xf32> to vector<64x128xf32>
      %99 = arith.subf %86, %98 : vector<64x128xf32>
      %cst_56 = arith.constant 9.99999974E-6 : f32
      %100 = vector.broadcast %cst_56 : f32 to vector<64x1xf32>
      %101 = arith.addf %97, %100 : vector<64x1xf32>
      %102 = math.rsqrt %101 : vector<64x1xf32>
      %103 = vector.broadcast %102 : vector<64x1xf32> to vector<64x128xf32>
      %104 = arith.mulf %99, %103 : vector<64x128xf32>
      %c0_57 = arith.constant 0 : index
      %c0_58 = arith.constant 0 : index
      %105 = vector.load %arg8[%c0_57, %c0_58] : memref<1x128xf32, #tpu.memory_space<vmem>>, vector<1x128xf32>
      %106 = vector.broadcast %105 : vector<1x128xf32> to vector<64x128xf32>
      %107 = arith.mulf %104, %106 : vector<64x128xf32>
      %c0_59 = arith.constant 0 : index
      %c0_60 = arith.constant 0 : index
      %108 = vector.load %arg9[%c0_59, %c0_60] : memref<1x128xf32, #tpu.memory_space<vmem>>, vector<1x128xf32>
      %109 = vector.broadcast %108 : vector<1x128xf32> to vector<64x128xf32>
      %110 = arith.addf %107, %109 : vector<64x128xf32>
      %cst_61 = arith.constant 0.000000e+00 : f32
      %111 = vector.broadcast %cst_61 : f32 to vector<64x128xf32>
      %112 = arith.maximumf %110, %111 : vector<64x128xf32>
      %113 = arith.truncf %112 : vector<64x128xf32> to vector<64x128xbf16>
      %c0_62 = arith.constant 0 : index
      %c0_63 = arith.constant 0 : index
      %114 = vector.load %arg17[%c0_62, %c0_63] : memref<64x128xbf16, #tpu.memory_space<vmem>>, vector<64x128xbf16>
      tpu.vector_store %arg17[%c0_62, %c0_63], %113 {strides = array<i32>} : memref<64x128xbf16, #tpu.memory_space<vmem>>, vector<64x128xbf16>,
      %cst_64 = arith.constant 0.000000e+00 : f32
      %115 = vector.broadcast %cst_64 : f32 to vector<64x1xf32>
      %c0_65 = arith.constant 0 : index
      %c0_66 = arith.constant 0 : index
      %116 = vector.load %arg13[%c0_65, %c0_66] : memref<64x1xf32, #tpu.memory_space<vmem>>, vector<64x1xf32>
      tpu.vector_store %arg13[%c0_65, %c0_66], %115 {strides = array<i32>} : memref<64x1xf32, #tpu.memory_space<vmem>>, vector<64x1xf32>,
      %cst_67 = arith.constant 0.000000e+00 : f32
      %117 = vector.broadcast %cst_67 : f32 to vector<64x1xf32>
      %c0_68 = arith.constant 0 : index
      %c0_69 = arith.constant 0 : index
      %118 = vector.load %arg14[%c0_68, %c0_69] : memref<64x1xf32, #tpu.memory_space<vmem>>, vector<64x1xf32>
      tpu.vector_store %arg14[%c0_68, %c0_69], %117 {strides = array<i32>} : memref<64x1xf32, #tpu.memory_space<vmem>>, vector<64x1xf32>,
      %cst_70 = arith.constant 0.000000e+00 : f32
      %119 = vector.broadcast %cst_70 : f32 to vector<64x1xf32>
      %c0_71 = arith.constant 0 : index
      %c0_72 = arith.constant 0 : index
      %120 = vector.load %arg15[%c0_71, %c0_72] : memref<64x1xf32, #tpu.memory_space<vmem>>, vector<64x1xf32>
      tpu.vector_store %arg15[%c0_71, %c0_72], %119 {strides = array<i32>} : memref<64x1xf32, #tpu.memory_space<vmem>>, vector<64x1xf32>,
      %cst_73 = arith.constant 0.000000e+00 : f32
      %121 = vector.broadcast %cst_73 : f32 to vector<64x1xf32>
      %c0_74 = arith.constant 0 : index
      %c0_75 = arith.constant 0 : index
      %122 = vector.load %arg16[%c0_74, %c0_75] : memref<64x1xf32, #tpu.memory_space<vmem>>, vector<64x1xf32>
      tpu.vector_store %arg16[%c0_74, %c0_75], %121 {strides = array<i32>} : memref<64x1xf32, #tpu.memory_space<vmem>>, vector<64x1xf32>,
    } else {
    }
    %c0 = arith.constant 0 : index
    %c0_1 = arith.constant 0 : index
    %3 = vector.load %arg17[%c0, %c0_1] : memref<64x128xbf16, #tpu.memory_space<vmem>>, vector<64x128xbf16>
    %c0_2 = arith.constant 0 : index
    %c0_3 = arith.constant 0 : index
    %4 = vector.load %arg10[%c0_2, %c0_3] : memref<128x256xbf16, #tpu.memory_space<vmem>>, vector<128x256xbf16>
    %cst = arith.constant dense<0.000000e+00> : vector<64x256xf32>
    %5 = tpu.matmul %3, %4, %cst {dimension_numbers = #tpu.dot_dimension_numbers<[1], [0], [0], [1], [0, 0, 1, 1], [], []>} : vector<64x128xbf16>, vector<128x256xbf16>, vector<64x256xf32> -> vector<64x256xf32>
    %c0_4 = arith.constant 0 : index
    %c0_5 = arith.constant 0 : index
    %6 = vector.load %arg11[%c0_4, %c0_5] : memref<1x256xf32, #tpu.memory_space<vmem>>, vector<1x256xf32>
    %7 = vector.broadcast %6 : vector<1x256xf32> to vector<64x256xf32>
    %8 = arith.addf %5, %7 : vector<64x256xf32>
    %c0_6 = arith.constant 0 : index
    %c0_7 = arith.constant 0 : index
    %9 = vector.load %arg12[%c0_6, %c0_7] : memref<64x256xf32, #tpu.memory_space<vmem>>, vector<64x256xf32>
    tpu.vector_store %arg12[%c0_6, %c0_7], %8 {strides = array<i32>} : memref<64x256xf32, #tpu.memory_space<vmem>>, vector<64x256xf32>,
    %c128_i32 = arith.constant 128 : i32
    %10 = arith.muli %arg0, %c128_i32 : i32
    %11 = tpu.iota {dimensions = array<i32: 1>} : vector<1x128xi32>
    %12 = vector.broadcast %10 : i32 to vector<1x128xi32>
    %13 = arith.addi %12, %11 : vector<1x128xi32>
    %c250_i32 = arith.constant 250 : i32
    %14 = vector.broadcast %c250_i32 : i32 to vector<1x128xi32>
    %15 = arith.cmpi slt, %13, %14 : vector<1x128xi32>
    %16 = vector.extract_strided_slice %8 {offsets = [0, 0], sizes = [64, 128], strides = [1, 1]} : vector<64x256xf32> to vector<64x128xf32>
    %cst_8 = arith.constant 0.000000e+00 : f32
    %17 = vector.shape_cast %15 : vector<1x128xi1> to vector<1x128xi1>
    %18 = vector.broadcast %17 : vector<1x128xi1> to vector<64x128xi1>
    %19 = vector.broadcast %cst_8 : f32 to vector<64x128xf32>
    %20 = arith.select %18, %16, %19 : vector<64x128xi1>, vector<64x128xf32>
    %21 = vector.extract_strided_slice %8 {offsets = [0, 128], sizes = [64, 128], strides = [1, 1]} : vector<64x256xf32> to vector<64x128xf32>
    %cst_9 = arith.constant 0.000000e+00 : f32
    %22 = vector.shape_cast %15 : vector<1x128xi1> to vector<1x128xi1>
    %23 = vector.broadcast %22 : vector<1x128xi1> to vector<64x128xi1>
    %24 = vector.broadcast %cst_9 : f32 to vector<64x128xf32>
    %25 = arith.select %23, %21, %24 : vector<64x128xi1>, vector<64x128xf32>
    %c0_10 = arith.constant 0 : index
    %c0_11 = arith.constant 0 : index
    %26 = vector.load %arg13[%c0_10, %c0_11] : memref<64x1xf32, #tpu.memory_space<vmem>>, vector<64x1xf32>
    %cst_12 = arith.constant dense<0.000000e+00> : vector<64xf32>
    %27 = vector.multi_reduction <add>, %20, %cst_12 [1] : vector<64x128xf32> to vector<64xf32>
    %28 = vector.shape_cast %27 : vector<64xf32> to vector<64x1xf32>
    %29 = arith.addf %26, %28 : vector<64x1xf32>
    %c0_13 = arith.constant 0 : index
    %c0_14 = arith.constant 0 : index
    %30 = vector.load %arg13[%c0_13, %c0_14] : memref<64x1xf32, #tpu.memory_space<vmem>>, vector<64x1xf32>
    tpu.vector_store %arg13[%c0_13, %c0_14], %29 {strides = array<i32>} : memref<64x1xf32, #tpu.memory_space<vmem>>, vector<64x1xf32>,
    %c0_15 = arith.constant 0 : index
    %c0_16 = arith.constant 0 : index
    %31 = vector.load %arg14[%c0_15, %c0_16] : memref<64x1xf32, #tpu.memory_space<vmem>>, vector<64x1xf32>
    %cst_17 = arith.constant dense<0.000000e+00> : vector<64xf32>
    %32 = vector.multi_reduction <add>, %25, %cst_17 [1] : vector<64x128xf32> to vector<64xf32>
    %33 = vector.shape_cast %32 : vector<64xf32> to vector<64x1xf32>
    %34 = arith.addf %31, %33 : vector<64x1xf32>
    %c0_18 = arith.constant 0 : index
    %c0_19 = arith.constant 0 : index
    %35 = vector.load %arg14[%c0_18, %c0_19] : memref<64x1xf32, #tpu.memory_space<vmem>>, vector<64x1xf32>
    tpu.vector_store %arg14[%c0_18, %c0_19], %34 {strides = array<i32>} : memref<64x1xf32, #tpu.memory_space<vmem>>, vector<64x1xf32>,
    %c0_20 = arith.constant 0 : index
    %c0_21 = arith.constant 0 : index
    %36 = vector.load %arg15[%c0_20, %c0_21] : memref<64x1xf32, #tpu.memory_space<vmem>>, vector<64x1xf32>
    %37 = arith.mulf %20, %20 : vector<64x128xf32>
    %cst_22 = arith.constant dense<0.000000e+00> : vector<64xf32>
    %38 = vector.multi_reduction <add>, %37, %cst_22 [1] : vector<64x128xf32> to vector<64xf32>
    %39 = vector.shape_cast %38 : vector<64xf32> to vector<64x1xf32>
    %40 = arith.addf %36, %39 : vector<64x1xf32>
    %c0_23 = arith.constant 0 : index
    %c0_24 = arith.constant 0 : index
    %41 = vector.load %arg15[%c0_23, %c0_24] : memref<64x1xf32, #tpu.memory_space<vmem>>, vector<64x1xf32>
    tpu.vector_store %arg15[%c0_23, %c0_24], %40 {strides = array<i32>} : memref<64x1xf32, #tpu.memory_space<vmem>>, vector<64x1xf32>,
    %c0_25 = arith.constant 0 : index
    %c0_26 = arith.constant 0 : index
    %42 = vector.load %arg16[%c0_25, %c0_26] : memref<64x1xf32, #tpu.memory_space<vmem>>, vector<64x1xf32>
    %43 = arith.mulf %25, %25 : vector<64x128xf32>
    %cst_27 = arith.constant dense<0.000000e+00> : vector<64xf32>
    %44 = vector.multi_reduction <add>, %43, %cst_27 [1] : vector<64x128xf32> to vector<64xf32>
    %45 = vector.shape_cast %44 : vector<64xf32> to vector<64x1xf32>
    %46 = arith.addf %42, %45 : vector<64x1xf32>
    %c0_28 = arith.constant 0 : index
    %c0_29 = arith.constant 0 : index
    %47 = vector.load %arg16[%c0_28, %c0_29] : memref<64x1xf32, #tpu.memory_space<vmem>>, vector<64x1xf32>
    tpu.vector_store %arg16[%c0_28, %c0_29], %46 {strides = array<i32>} : memref<64x1xf32, #tpu.memory_space<vmem>>, vector<64x1xf32>,
    return
  }
  func.func @transform_0(%arg0: i32) -> (i32, i32) {
    %c0_i32 = arith.constant 0 : i32
    %c0_i32_0 = arith.constant 0 : i32
    %c0_i32_1 = arith.constant 0 : i32
    return %c0_i32, %c0_i32_0 : i32, i32
  }
  func.func @transform_1(%arg0: i32) -> (i32, i32) {
    %c0_i32 = arith.constant 0 : i32
    %c0_i32_0 = arith.constant 0 : i32
    %c0_i32_1 = arith.constant 0 : i32
    return %c0_i32, %c0_i32_0 : i32, i32
  }
  func.func @transform_2(%arg0: i32) -> (i32, i32) {
    %c0_i32 = arith.constant 0 : i32
    %c0_i32_0 = arith.constant 0 : i32
    %c0_i32_1 = arith.constant 0 : i32
    return %c0_i32, %c0_i32_0 : i32, i32
  }
  func.func @transform_3(%arg0: i32) -> (i32, i32) {
    %c0_i32 = arith.constant 0 : i32
    %c0_i32_0 = arith.constant 0 : i32
    %c0_i32_1 = arith.constant 0 : i32
    return %c0_i32, %c0_i32_0 : i32, i32
  }
  func.func @transform_4(%arg0: i32) -> (i32, i32) {
    %c0_i32 = arith.constant 0 : i32
    %c0_i32_0 = arith.constant 0 : i32
    %c0_i32_1 = arith.constant 0 : i32
    return %c0_i32, %c0_i32_0 : i32, i32
  }
  func.func @transform_5(%arg0: i32) -> (i32, i32) {
    %c0_i32 = arith.constant 0 : i32
    %c0_i32_0 = arith.constant 0 : i32
    %c0_i32_1 = arith.constant 0 : i32
    return %c0_i32, %c0_i32_0 : i32, i32
  }
  func.func @transform_6(%arg0: i32) -> (i32, i32) {
    %c0_i32 = arith.constant 0 : i32
    %c0_i32_0 = arith.constant 0 : i32
    %c0_i32_1 = arith.constant 0 : i32
    return %c0_i32, %c0_i32_0 : i32, i32
  }
  func.func @transform_7(%arg0: i32) -> (i32, i32) {
    %c0_i32 = arith.constant 0 : i32
    %c0_i32_0 = arith.constant 0 : i32
    %c0_i32_1 = arith.constant 0 : i32
    return %c0_i32, %c0_i32_0 : i32, i32
  }
  func.func @transform_8(%arg0: i32) -> (i32, i32) {
    %c0_i32 = arith.constant 0 : i32
    %c0_i32_0 = arith.constant 0 : i32
    %c0_i32_1 = arith.constant 0 : i32
    return %c0_i32, %c0_i32_0 : i32, i32
  }
  func.func @transform_9(%arg0: i32) -> (i32, i32) {
    %c0_i32 = arith.constant 0 : i32
    %c0_i32_0 = arith.constant 0 : i32
    return %c0_i32, %arg0 : i32, i32
  }
  func.func @transform_10(%arg0: i32) -> (i32, i32) {
    %c0_i32 = arith.constant 0 : i32
    %c0_i32_0 = arith.constant 0 : i32
    return %c0_i32, %arg0 : i32, i32
  }
  func.func @transform_11(%arg0: i32) -> (i32, i32) {
    %c0_i32 = arith.constant 0 : i32
    %c0_i32_0 = arith.constant 0 : i32
    return %c0_i32, %arg0 : i32, i32
  }
  func.func @transform_12(%arg0: i32) -> (i32, i32) {
    %c0_i32 = arith.constant 0 : i32
    %c0_i32_0 = arith.constant 0 : i32
    %c0_i32_1 = arith.constant 0 : i32
    return %c0_i32, %c0_i32_0 : i32, i32
  }
  func.func @transform_13(%arg0: i32) -> (i32, i32) {
    %c0_i32 = arith.constant 0 : i32
    %c0_i32_0 = arith.constant 0 : i32
    %c0_i32_1 = arith.constant 0 : i32
    return %c0_i32, %c0_i32_0 : i32, i32
  }
  func.func @transform_14(%arg0: i32) -> (i32, i32) {
    %c0_i32 = arith.constant 0 : i32
    %c0_i32_0 = arith.constant 0 : i32
    %c0_i32_1 = arith.constant 0 : i32
    return %c0_i32, %c0_i32_0 : i32, i32
  }
  func.func @transform_15(%arg0: i32) -> (i32, i32) {
    %c0_i32 = arith.constant 0 : i32
    %c0_i32_0 = arith.constant 0 : i32
    %c0_i32_1 = arith.constant 0 : i32
    return %c0_i32, %c0_i32_0 : i32, i32
  }
}

</mosaic_0001>

<llo_original>
// kernel: tpu_custom_call.1
$region0: #{tpu_custom_call.1}
  #allocation0 [shape = 'u32[]', space=smem, size = 0x4, offset = 0x4, fixed_abs, tag = 'smem constant byte address 0x4 - core index']
  #allocation1 [shape = 'u32[144,128]{1,0:T(1,128)}', space=vmem, size = 0x12000, scoped, tag = 'internal scratch']
  #allocation2 [shape = 'bf16[64,128]{1,0:T(16,128)(2,1)}', space=vmem, size = 0x4000, scoped, tag = 'scratch operand']
  %s0 = inlined_call_operand.hbm [shape: f32[64,256], index: 0, kind: input, shape index: {}]
  %s1 = inlined_call_operand.hbm [shape: bf16[256,128], index: 1, kind: input, shape index: {}]
  %s2 = inlined_call_operand.vmem [shape: f32[1,128], index: 2, kind: input, shape index: {}]
  %s3 = inlined_call_operand.vmem [shape: f32[1,128], index: 3, kind: input, shape index: {}]
  %s4 = inlined_call_operand.vmem [shape: f32[1,128], index: 4, kind: input, shape index: {}]
  %s5 = inlined_call_operand.hbm [shape: bf16[128,128], index: 5, kind: input, shape index: {}]
  %s6 = inlined_call_operand.vmem [shape: f32[1,128], index: 6, kind: input, shape index: {}]
  %s7 = inlined_call_operand.vmem [shape: f32[1,128], index: 7, kind: input, shape index: {}]
  %s8 = inlined_call_operand.vmem [shape: f32[1,128], index: 8, kind: input, shape index: {}]
  %s9 = inlined_call_operand.hbm [shape: bf16[128,512], index: 9, kind: input, shape index: {}]
  %s10 = inlined_call_operand.vmem [shape: f32[1,512], index: 10, kind: input, shape index: {}]
  %s11 = inlined_call_operand.hbm [shape: f32[64,512], index: 11, kind: output, shape index: {0}]
  %s12 = inlined_call_operand.vmem [shape: f32[64,1], index: 12, kind: output, shape index: {1}]
  %s13 = inlined_call_operand.vmem [shape: f32[64,1], index: 13, kind: output, shape index: {2}]
  %s14 = inlined_call_operand.vmem [shape: f32[64,1], index: 14, kind: output, shape index: {3}]
  %s15 = inlined_call_operand.vmem [shape: f32[64,1], index: 15, kind: output, shape index: {4}]
  %16 = xla_tuple %s11, %s12, %s13, %s14, %s15
  %s17 = sld [smem:[#allocation0]]
  $region129: #{tpu_custom_call.1} parent=0
    _
  %s19 = ssub.s32 1, %s17
  %s20 = scalar_select 0, %s19, %s17
  $region1: #{tpu_custom_call.1} parent=0
    #allocation3 [shape = 'u8[65536]{0}', space=vmem, size = 0x10000, scoped, tag = 'input window, operand 0, single buffered']
    #allocation4 [shape = 's32[2]{0}', space=sflag, size = 0x8, scoped, tag = 'scoped memory for tpu_custom_call.1']
    #allocation5 [shape = 's32[2]{0}', space=sflag, size = 0x8, scoped, tag = 'scoped memory for tpu_custom_call.1']
    #allocation6 [shape = 'u8[65536]{0}', space=vmem, size = 0x10000, scoped, tag = 'input window, operand 1, single buffered']
    #allocation7 [shape = 's32[1]{0}', space=sflag, size = 0x4, scoped, tag = 'scoped memory for tpu_custom_call.1']
    #allocation8 [shape = 'u8[32768]{0}', space=vmem, size = 0x8000, scoped, tag = 'input window, operand 5, single buffered']
    #allocation9 [shape = 'u8[131072]{0}', space=vmem, size = 0x20000, scoped, tag = 'input window, operand 9']
    #allocation10 [shape = 's32[2]{0}', space=sflag, size = 0x8, scoped, tag = 'scoped memory for tpu_custom_call.1']
    #allocation11 [shape = 'u8[131072]{0}', space=vmem, size = 0x20000, scoped, tag = 'output window, operand 0']
    %21 = vsyncpa [#allocation4], 0
    %22 = vsyncpa [#allocation7], 0
    %23 = vsyncpa [#allocation10], 0
    %s24 = scalar_lea.sflag [#allocation10], 1
    %25 = vsyncpa %s24, 0
    %26 = vsyncpa [#allocation5], 0
    %s27 = scalar_lea.sflag [#allocation5], 1
    %28 = vsyncpa %s27, 0
    loop: start=0, step=1, limit=4
    $region2: #{tpu_custom_call.1} parent=1 // loop_pre_header
      _
    $region3: #{tpu_custom_call.1} parent=1 // loop_header
      %s30 = sphi 0, %s34
      %p31 = scmp.ge.s32.totalorder %s30, 4
      %s38 = sphi 0, %s38
      %s40 = sphi 0, %s38
      %s41 = sphi 0, %s40
      %s55 = sphi 0, %s41
      %s59 = sphi 0, %s59
      %s61 = sphi 0, %s59
      %s62 = sphi 0, %s61
      %s76 = sphi 0, %s62
      %s80 = sphi 0, %s80
      %s82 = sphi 0, %s80
      %s83 = sphi 0, %s82
      %s97 = sphi 0, %s83
      %s101 = sphi 0, %s101
      %s103 = sphi 0, %s101
      %s104 = sphi 0, %s103
      %s118 = sphi 0, %s104
      %s122 = sphi 0, %s122
      %s124 = sphi 0, %s122
      %s125 = sphi 0, %s124
      %s139 = sphi 0, %s125
      %s143 = sphi 0, %s143
      %s145 = sphi 0, %s143
      %s146 = sphi 0, %s145
      %s160 = sphi 0, %s146
      %s164 = sphi 0, %s164
      %s166 = sphi 0, %s164
      %s167 = sphi 0, %s166
      %s181 = sphi 0, %s167
      %s185 = sphi 0, %s185
      %s187 = sphi 0, %s185
      %s188 = sphi 0, %s187
      %s202 = sphi 0, %s188
      %s206 = sphi 0, %s206
      %s208 = sphi 0, %s206
      %s209 = sphi 0, %s208
      %s223 = sphi 0, %s209
      %s229 = sphi 0, %s231
      %s232 = sphi 0, %s229
      %s233 = sphi 0, %s232
      %s249 = sphi 0, %s233
      %s255 = sphi 0, %s257
      %s258 = sphi 0, %s255
      %s259 = sphi 0, %s258
      %s275 = sphi 0, %s259
      %s281 = sphi 0, %s283
      %s284 = sphi 0, %s281
      %s285 = sphi 0, %s284
      %s301 = sphi 0, %s285
      %s305 = sphi 0, %s305
      %s307 = sphi 0, %s305
      %s308 = sphi 0, %s307
      %s322 = sphi 0, %s308
      %s326 = sphi 0, %s326
      %s328 = sphi 0, %s326
      %s329 = sphi 0, %s328
      %s343 = sphi 0, %s329
      %s347 = sphi 0, %s347
      %s349 = sphi 0, %s347
      %s350 = sphi 0, %s349
      %s364 = sphi 0, %s350
      %s368 = sphi 0, %s368
      %s370 = sphi 0, %s368
      %s371 = sphi 0, %s370
      %s385 = sphi 0, %s371
    $region4: #{tpu_custom_call.1} parent=1 // loop_header_branch
      %33 = sbr.rel (%p31) target = $region8
    $region5: #{tpu_custom_call.1} parent=1 // loop_body
      %s35 = ssub.s32 %s30, 1
      %s36 = ssub.s32 %s30, 2
      %s37 = sadd.s32 %s30, 1
      %s39 = sadd.s32 %s38, 1
      %p42 = scmp.eq.s32.totalorder %s30, 1
      %p43 = scmp.ne.s32.totalorder %s38, %s40
      %p44 = scmp.eq.s32.totalorder %s30, 0
      %p45 = por %p43, %p44
      %p46 = scmp.ne.s32.totalorder %s38, %s40
      %p47 = scmp.eq.s32.totalorder %s35, 1
      %p48 = por %p46, %p47
      %p49 = scmp.ne.s32.totalorder %s40, %s41
      %p50 = scmp.eq.s32.totalorder %s35, 0
      %p51 = por %p49, %p50
      %p52 = scmp.ne.s32.totalorder %s40, %s41
      %p53 = scmp.eq.s32.totalorder %s36, 1
      %p54 = por %p52, %p53
      %p56 = scmp.ne.s32.totalorder %s41, %s55
      %p57 = scmp.eq.s32.totalorder %s36, 0
      %p58 = por %p56, %p57
      %s60 = sadd.s32 %s59, 1
      %p63 = scmp.eq.s32.totalorder %s30, 1
      %p64 = scmp.ne.s32.totalorder %s59, %s61
      %p65 = scmp.eq.s32.totalorder %s30, 0
      %p66 = por %p64, %p65
      %p67 = scmp.ne.s32.totalorder %s59, %s61
      %p68 = scmp.eq.s32.totalorder %s35, 1
      %p69 = por %p67, %p68
      %p70 = scmp.ne.s32.totalorder %s61, %s62
      %p71 = scmp.eq.s32.totalorder %s35, 0
      %p72 = por %p70, %p71
      %p73 = scmp.ne.s32.totalorder %s61, %s62
      %p74 = scmp.eq.s32.totalorder %s36, 1
      %p75 = por %p73, %p74
      %p77 = scmp.ne.s32.totalorder %s62, %s76
      %p78 = scmp.eq.s32.totalorder %s36, 0
      %p79 = por %p77, %p78
      %s81 = sadd.s32 %s80, 1
      %p84 = scmp.eq.s32.totalorder %s30, 1
      %p85 = scmp.ne.s32.totalorder %s80, %s82
      %p86 = scmp.eq.s32.totalorder %s30, 0
      %p87 = por %p85, %p86
      %p88 = scmp.ne.s32.totalorder %s80, %s82
      %p89 = scmp.eq.s32.totalorder %s35, 1
      %p90 = por %p88, %p89
      %p91 = scmp.ne.s32.totalorder %s82, %s83
      %p92 = scmp.eq.s32.totalorder %s35, 0
      %p93 = por %p91, %p92
      %p94 = scmp.ne.s32.totalorder %s82, %s83
      %p95 = scmp.eq.s32.totalorder %s36, 1
      %p96 = por %p94, %p95
      %p98 = scmp.ne.s32.totalorder %s83, %s97
      %p99 = scmp.eq.s32.totalorder %s36, 0
      %p100 = por %p98, %p99
      %s102 = sadd.s32 %s101, 1
      %p105 = scmp.eq.s32.totalorder %s30, 1
      %p106 = scmp.ne.s32.totalorder %s101, %s103
      %p107 = scmp.eq.s32.totalorder %s30, 0
      %p108 = por %p106, %p107
      %p109 = scmp.ne.s32.totalorder %s101, %s103
      %p110 = scmp.eq.s32.totalorder %s35, 1
      %p111 = por %p109, %p110
      %p112 = scmp.ne.s32.totalorder %s103, %s104
      %p113 = scmp.eq.s32.totalorder %s35, 0
      %p114 = por %p112, %p113
      %p115 = scmp.ne.s32.totalorder %s103, %s104
      %p116 = scmp.eq.s32.totalorder %s36, 1
      %p117 = por %p115, %p116
      %p119 = scmp.ne.s32.totalorder %s104, %s118
      %p120 = scmp.eq.s32.totalorder %s36, 0
      %p121 = por %p119, %p120
      %s123 = sadd.s32 %s122, 1
      %p126 = scmp.eq.s32.totalorder %s30, 1
      %p127 = scmp.ne.s32.totalorder %s122, %s124
      %p128 = scmp.eq.s32.totalorder %s30, 0
      %p129 = por %p127, %p128
      %p130 = scmp.ne.s32.totalorder %s122, %s124
      %p131 = scmp.eq.s32.totalorder %s35, 1
      %p132 = por %p130, %p131
      %p133 = scmp.ne.s32.totalorder %s124, %s125
      %p134 = scmp.eq.s32.totalorder %s35, 0
      %p135 = por %p133, %p134
      %p136 = scmp.ne.s32.totalorder %s124, %s125
      %p137 = scmp.eq.s32.totalorder %s36, 1
      %p138 = por %p136, %p137
      %p140 = scmp.ne.s32.totalorder %s125, %s139
      %p141 = scmp.eq.s32.totalorder %s36, 0
      %p142 = por %p140, %p141
      %s144 = sadd.s32 %s143, 1
      %p147 = scmp.eq.s32.totalorder %s30, 1
      %p148 = scmp.ne.s32.totalorder %s143, %s145
      %p149 = scmp.eq.s32.totalorder %s30, 0
      %p150 = por %p148, %p149
      %p151 = scmp.ne.s32.totalorder %s143, %s145
      %p152 = scmp.eq.s32.totalorder %s35, 1
      %p153 = por %p151, %p152
      %p154 = scmp.ne.s32.totalorder %s145, %s146
      %p155 = scmp.eq.s32.totalorder %s35, 0
      %p156 = por %p154, %p155
      %p157 = scmp.ne.s32.totalorder %s145, %s146
      %p158 = scmp.eq.s32.totalorder %s36, 1
      %p159 = por %p157, %p158
      %p161 = scmp.ne.s32.totalorder %s146, %s160
      %p162 = scmp.eq.s32.totalorder %s36, 0
      %p163 = por %p161, %p162
      %s165 = sadd.s32 %s164, 1
      %p168 = scmp.eq.s32.totalorder %s30, 1
      %p169 = scmp.ne.s32.totalorder %s164, %s166
      %p170 = scmp.eq.s32.totalorder %s30, 0
      %p171 = por %p169, %p170
      %p172 = scmp.ne.s32.totalorder %s164, %s166
      %p173 = scmp.eq.s32.totalorder %s35, 1
      %p174 = por %p172, %p173
      %p175 = scmp.ne.s32.totalorder %s166, %s167
      %p176 = scmp.eq.s32.totalorder %s35, 0
      %p177 = por %p175, %p176
      %p178 = scmp.ne.s32.totalorder %s166, %s167
      %p179 = scmp.eq.s32.totalorder %s36, 1
      %p180 = por %p178, %p179
      %p182 = scmp.ne.s32.totalorder %s167, %s181
      %p183 = scmp.eq.s32.totalorder %s36, 0
      %p184 = por %p182, %p183
      %s186 = sadd.s32 %s185, 1
      %p189 = scmp.eq.s32.totalorder %s30, 1
      %p190 = scmp.ne.s32.totalorder %s185, %s187
      %p191 = scmp.eq.s32.totalorder %s30, 0
      %p192 = por %p190, %p191
      %p193 = scmp.ne.s32.totalorder %s185, %s187
      %p194 = scmp.eq.s32.totalorder %s35, 1
      %p195 = por %p193, %p194
      %p196 = scmp.ne.s32.totalorder %s187, %s188
      %p197 = scmp.eq.s32.totalorder %s35, 0
      %p198 = por %p196, %p197
      %p199 = scmp.ne.s32.totalorder %s187, %s188
      %p200 = scmp.eq.s32.totalorder %s36, 1
      %p201 = por %p199, %p200
      %p203 = scmp.ne.s32.totalorder %s188, %s202
      %p204 = scmp.eq.s32.totalorder %s36, 0
      %p205 = por %p203, %p204
      %s207 = sadd.s32 %s206, 1
      %p210 = scmp.eq.s32.totalorder %s30, 1
      %p211 = scmp.ne.s32.totalorder %s206, %s208
      %p212 = scmp.eq.s32.totalorder %s30, 0
      %p213 = por %p211, %p212
      %p214 = scmp.ne.s32.totalorder %s206, %s208
      %p215 = scmp.eq.s32.totalorder %s35, 1
      %p216 = por %p214, %p215
      %p217 = scmp.ne.s32.totalorder %s208, %s209
      %p218 = scmp.eq.s32.totalorder %s35, 0
      %p219 = por %p217, %p218
      %p220 = scmp.ne.s32.totalorder %s208, %s209
      %p221 = scmp.eq.s32.totalorder %s36, 1
      %p222 = por %p220, %p221
      %p224 = scmp.ne.s32.totalorder %s209, %s223
      %p225 = scmp.eq.s32.totalorder %s36, 0
      %p226 = por %p224, %p225
      %s227 = ssub.s32 %s30, %s37
      %p228 = scmp.eq.s32.totalorder %s227, 0
      %s230 = sadd.s32 %s229, 1
      %s231 = scalar_select %p228, %s229, %s230
      %p234 = pneg %p228
      %p235 = scmp.eq.s32.totalorder %s30, 1
      %p236 = por %p234, %p235
      %p237 = scmp.ne.s32.totalorder %s229, %s232
      %p238 = scmp.eq.s32.totalorder %s30, 0
      %p239 = por %p237, %p238
      %p240 = scmp.ne.s32.totalorder %s229, %s232
      %p241 = scmp.eq.s32.totalorder %s35, 1
      %p242 = por %p240, %p241
      %p243 = scmp.ne.s32.totalorder %s232, %s233
      %p244 = scmp.eq.s32.totalorder %s35, 0
      %p245 = por %p243, %p244
      %p246 = scmp.ne.s32.totalorder %s232, %s233
      %p247 = scmp.eq.s32.totalorder %s36, 1
      %p248 = por %p246, %p247
      %p250 = scmp.ne.s32.totalorder %s233, %s249
      %p251 = scmp.eq.s32.totalorder %s36, 0
      %p252 = por %p250, %p251
      %s253 = ssub.s32 %s30, %s37
      %p254 = scmp.eq.s32.totalorder %s253, 0
      %s256 = sadd.s32 %s255, 1
      %s257 = scalar_select %p254, %s255, %s256
      %p260 = pneg %p254
      %p261 = scmp.eq.s32.totalorder %s30, 1
      %p262 = por %p260, %p261
      %p263 = scmp.ne.s32.totalorder %s255, %s258
      %p264 = scmp.eq.s32.totalorder %s30, 0
      %p265 = por %p263, %p264
      %p266 = scmp.ne.s32.totalorder %s255, %s258
      %p267 = scmp.eq.s32.totalorder %s35, 1
      %p268 = por %p266, %p267
      %p269 = scmp.ne.s32.totalorder %s258, %s259
      %p270 = scmp.eq.s32.totalorder %s35, 0
      %p271 = por %p269, %p270
      %p272 = scmp.ne.s32.totalorder %s258, %s259
      %p273 = scmp.eq.s32.totalorder %s36, 1
      %p274 = por %p272, %p273
      %p276 = scmp.ne.s32.totalorder %s259, %s275
      %p277 = scmp.eq.s32.totalorder %s36, 0
      %p278 = por %p276, %p277
      %s279 = ssub.s32 %s30, %s37
      %p280 = scmp.eq.s32.totalorder %s279, 0
      %s282 = sadd.s32 %s281, 1
      %s283 = scalar_select %p280, %s281, %s282
      %p286 = pneg %p280
      %p287 = scmp.eq.s32.totalorder %s30, 1
      %p288 = por %p286, %p287
      %p289 = scmp.ne.s32.totalorder %s281, %s284
      %p290 = scmp.eq.s32.totalorder %s30, 0
      %p291 = por %p289, %p290
      %p292 = scmp.ne.s32.totalorder %s281, %s284
      %p293 = scmp.eq.s32.totalorder %s35, 1
      %p294 = por %p292, %p293
      %p295 = scmp.ne.s32.totalorder %s284, %s285
      %p296 = scmp.eq.s32.totalorder %s35, 0
      %p297 = por %p295, %p296
      %p298 = scmp.ne.s32.totalorder %s284, %s285
      %p299 = scmp.eq.s32.totalorder %s36, 1
      %p300 = por %p298, %p299
      %p302 = scmp.ne.s32.totalorder %s285, %s301
      %p303 = scmp.eq.s32.totalorder %s36, 0
      %p304 = por %p302, %p303
      %s306 = sadd.s32 %s305, 1
      %p309 = scmp.eq.s32.totalorder %s30, 1
      %p310 = scmp.ne.s32.totalorder %s305, %s307
      %p311 = scmp.eq.s32.totalorder %s30, 0
      %p312 = por %p310, %p311
      %p313 = scmp.ne.s32.totalorder %s305, %s307
      %p314 = scmp.eq.s32.totalorder %s35, 1
      %p315 = por %p313, %p314
      %p316 = scmp.ne.s32.totalorder %s307, %s308
      %p317 = scmp.eq.s32.totalorder %s35, 0
      %p318 = por %p316, %p317
      %p319 = scmp.ne.s32.totalorder %s307, %s308
      %p320 = scmp.eq.s32.totalorder %s36, 1
      %p321 = por %p319, %p320
      %p323 = scmp.ne.s32.totalorder %s308, %s322
      %p324 = scmp.eq.s32.totalorder %s36, 0
      %p325 = por %p323, %p324
      %s327 = sadd.s32 %s326, 1
      %p330 = scmp.eq.s32.totalorder %s30, 1
      %p331 = scmp.ne.s32.totalorder %s326, %s328
      %p332 = scmp.eq.s32.totalorder %s30, 0
      %p333 = por %p331, %p332
      %p334 = scmp.ne.s32.totalorder %s326, %s328
      %p335 = scmp.eq.s32.totalorder %s35, 1
      %p336 = por %p334, %p335
      %p337 = scmp.ne.s32.totalorder %s328, %s329
      %p338 = scmp.eq.s32.totalorder %s35, 0
      %p339 = por %p337, %p338
      %p340 = scmp.ne.s32.totalorder %s328, %s329
      %p341 = scmp.eq.s32.totalorder %s36, 1
      %p342 = por %p340, %p341
      %p344 = scmp.ne.s32.totalorder %s329, %s343
      %p345 = scmp.eq.s32.totalorder %s36, 0
      %p346 = por %p344, %p345
      %s348 = sadd.s32 %s347, 1
      %p351 = scmp.eq.s32.totalorder %s30, 1
      %p352 = scmp.ne.s32.totalorder %s347, %s349
      %p353 = scmp.eq.s32.totalorder %s30, 0
      %p354 = por %p352, %p353
      %p355 = scmp.ne.s32.totalorder %s347, %s349
      %p356 = scmp.eq.s32.totalorder %s35, 1
      %p357 = por %p355, %p356
      %p358 = scmp.ne.s32.totalorder %s349, %s350
      %p359 = scmp.eq.s32.totalorder %s35, 0
      %p360 = por %p358, %p359
      %p361 = scmp.ne.s32.totalorder %s349, %s350
      %p362 = scmp.eq.s32.totalorder %s36, 1
      %p363 = por %p361, %p362
      %p365 = scmp.ne.s32.totalorder %s350, %s364
      %p366 = scmp.eq.s32.totalorder %s36, 0
      %p367 = por %p365, %p366
      %s369 = sadd.s32 %s368, 1
      %p372 = scmp.eq.s32.totalorder %s30, 1
      %p373 = scmp.ne.s32.totalorder %s368, %s370
      %p374 = scmp.eq.s32.totalorder %s30, 0
      %p375 = por %p373, %p374
      %p376 = scmp.ne.s32.totalorder %s368, %s370
      %p377 = scmp.eq.s32.totalorder %s35, 1
      %p378 = por %p376, %p377
      %p379 = scmp.ne.s32.totalorder %s370, %s371
      %p380 = scmp.eq.s32.totalorder %s35, 0
      %p381 = por %p379, %p380
      %p382 = scmp.ne.s32.totalorder %s370, %s371
      %p383 = scmp.eq.s32.totalorder %s36, 1
      %p384 = por %p382, %p383
      %p386 = scmp.ne.s32.totalorder %s371, %s385
      %p387 = scmp.eq.s32.totalorder %s36, 0
      %p388 = por %p386, %p387
      %p389 = scmp.le.s32.totalorder 1, %s30
      %p390 = scmp.lt.s32.totalorder %s30, 3
      %p391 = pnand %p389, %p390
      %p392 = pneg %p391
      // Predicated region
      $region9: #{tpu_custom_call.1} parent=5 // pred_check
        _
      $region10: #{tpu_custom_call.1} parent=5 // pred_check_branch
        %394 = sbr.rel (%p391) target = $region12
      $region11: #{tpu_custom_call.1} parent=5 // pred_region
        %s395 = ssub.s32 %s30, 1
        // Predicated region
        $region13: #{tpu_custom_call.1} parent=11 // pred_check
          %p396 = pneg %p51
        $region14: #{tpu_custom_call.1} parent=11 // pred_check_branch
          %398 = sbr.rel (%p396) target = $region16
        $region15: #{tpu_custom_call.1} parent=11 // pred_region
          %s400 = ssub.s32 2048, 2048
          %401 = vsyncadd [#allocation4], %s400
          %s402 = sshll.u32 [#allocation3], 4
          %s403 = int_to_ptr.vmem [resolvable:$true] %s402
          %408 = dma.hbm_to_vmem [thread:$0]  %s0, 2048, %s403, [#allocation4], 256, 256, 16
        $region16: #{tpu_custom_call.1} parent=11 // pred_fallthru
          _
        // Predicated region
        $region17: #{tpu_custom_call.1} parent=11 // pred_check
          %p409 = pneg %p72
        $region18: #{tpu_custom_call.1} parent=11 // pred_check_branch
          %411 = sbr.rel (%p409) target = $region20
        $region19: #{tpu_custom_call.1} parent=11 // pred_region
          %s413 = ssub.s32 2048, 2048
          %414 = vsyncadd [#allocation7], %s413
          %s415 = sshll.u32 [#allocation6], 4
          %s416 = int_to_ptr.vmem [resolvable:$true] %s415
          %421 = dma.hbm_to_vmem [thread:$0]  %s1, 2048, %s416, [#allocation7], 64, 64, 4
        $region20: #{tpu_custom_call.1} parent=11 // pred_fallthru
          _
        // Predicated region
        $region21: #{tpu_custom_call.1} parent=11 // pred_check
          %p422 = pneg %p93
        $region22: #{tpu_custom_call.1} parent=11 // pred_check_branch
          %424 = sbr.rel (%p422) target = $region24
        $region23: #{tpu_custom_call.1} parent=11 // pred_region
          _
        $region24: #{tpu_custom_call.1} parent=11 // pred_fallthru
          _
        // Predicated region
        $region25: #{tpu_custom_call.1} parent=11 // pred_check
          %p425 = pneg %p114
        $region26: #{tpu_custom_call.1} parent=11 // pred_check_branch
          %427 = sbr.rel (%p425) target = $region28
        $region27: #{tpu_custom_call.1} parent=11 // pred_region
          _
        $region28: #{tpu_custom_call.1} parent=11 // pred_fallthru
          _
        // Predicated region
        $region29: #{tpu_custom_call.1} parent=11 // pred_check
          %p428 = pneg %p135
        $region30: #{tpu_custom_call.1} parent=11 // pred_check_branch
          %430 = sbr.rel (%p428) target = $region32
        $region31: #{tpu_custom_call.1} parent=11 // pred_region
          _
        $region32: #{tpu_custom_call.1} parent=11 // pred_fallthru
          _
        // Predicated region
        $region33: #{tpu_custom_call.1} parent=11 // pred_check
          %p431 = pneg %p156
        $region34: #{tpu_custom_call.1} parent=11 // pred_check_branch
          %433 = sbr.rel (%p431) target = $region36
        $region35: #{tpu_custom_call.1} parent=11 // pred_region
          %s435 = ssub.s32 1024, 1024
          %436 = vsyncadd [#allocation7], %s435
          %s437 = sshll.u32 [#allocation8], 4
          %s438 = int_to_ptr.vmem [resolvable:$true] %s437
          %443 = dma.hbm_to_vmem [thread:$0]  %s5, 1024, %s438, [#allocation7], 64, 64, 4
        $region36: #{tpu_custom_call.1} parent=11 // pred_fallthru
          _
        // Predicated region
        $region37: #{tpu_custom_call.1} parent=11 // pred_check
          %p444 = pneg %p177
        $region38: #{tpu_custom_call.1} parent=11 // pred_check_branch
          %446 = sbr.rel (%p444) target = $region40
        $region39: #{tpu_custom_call.1} parent=11 // pred_region
          _
        $region40: #{tpu_custom_call.1} parent=11 // pred_fallthru
          _
        // Predicated region
        $region41: #{tpu_custom_call.1} parent=11 // pred_check
          %p447 = pneg %p198
        $region42: #{tpu_custom_call.1} parent=11 // pred_check_branch
          %449 = sbr.rel (%p447) target = $region44
        $region43: #{tpu_custom_call.1} parent=11 // pred_region
          _
        $region44: #{tpu_custom_call.1} parent=11 // pred_fallthru
          _
        // Predicated region
        $region45: #{tpu_custom_call.1} parent=11 // pred_check
          %p450 = pneg %p219
        $region46: #{tpu_custom_call.1} parent=11 // pred_check_branch
          %452 = sbr.rel (%p450) target = $region48
        $region47: #{tpu_custom_call.1} parent=11 // pred_region
          _
        $region48: #{tpu_custom_call.1} parent=11 // pred_fallthru
          _
      $region12: #{tpu_custom_call.1} parent=5 // pred_fallthru
        _
      %p453 = scmp.lt.s32.totalorder %s30, 2
      // Predicated region
      $region49: #{tpu_custom_call.1} parent=5 // pred_check
        %p454 = pneg %p453
      $region50: #{tpu_custom_call.1} parent=5 // pred_check_branch
        %456 = sbr.rel (%p454) target = $region52
      $region51: #{tpu_custom_call.1} parent=5 // pred_region
        // Predicated region
        $region53: #{tpu_custom_call.1} parent=51 // pred_check
          %p457 = pneg %p239
        $region54: #{tpu_custom_call.1} parent=51 // pred_check_branch
          %459 = sbr.rel (%p457) target = $region56
        $region55: #{tpu_custom_call.1} parent=51 // pred_region
          %s460 = sand.u32 %s229, 1
          %s461 = scalar_lea.sflag [#allocation10], %s460
          %s462 = sand.u32 %s229, 1
          %s463 = smul.addr %s462, 128
          %s464 = scalar_lea.vmem [#allocation9], %s463
          %s465 = smul.u32 2, %s30
          %s467 = ssub.s32 2048, 2048
          %468 = vsyncadd %s461, %s467
          %s469 = smul.addr %s465, 64
          %s470 = scalar_lea.hbm %s9, %s469
          %s471 = sshll.u32 %s464, 4
          %s472 = int_to_ptr.vmem [resolvable:$true] %s471
          %477 = dma.hbm_to_vmem [thread:$0]  %s470, 2048, %s472, %s461, 256, 128, 8
        $region56: #{tpu_custom_call.1} parent=51 // pred_fallthru
          _
        // Predicated region
        $region57: #{tpu_custom_call.1} parent=51 // pred_check
          %p478 = pneg %p265
        $region58: #{tpu_custom_call.1} parent=51 // pred_check_branch
          %480 = sbr.rel (%p478) target = $region60
        $region59: #{tpu_custom_call.1} parent=51 // pred_region
          %s481 = smul.u32 2, %s30
          %p482 = scmp.lt.s32.totalorder %s481, 3
          %s483 = scalar_select %p482, %s481, 3
          %s484 = scalar_lea.vmem %s10, %s483
          %s485 = smul.u32 2, %s30
        $region60: #{tpu_custom_call.1} parent=51 // pred_fallthru
          _
      $region52: #{tpu_custom_call.1} parent=5 // pred_fallthru
        _
      %p486 = scmp.le.s32.totalorder 1, %s30
      %p487 = scmp.lt.s32.totalorder %s30, 3
      %p488 = pnand %p486, %p487
      %p489 = pneg %p488
      // Predicated region
      $region61: #{tpu_custom_call.1} parent=5 // pred_check
        _
      $region62: #{tpu_custom_call.1} parent=5 // pred_check_branch
        %491 = sbr.rel (%p488) target = $region64
      $region63: #{tpu_custom_call.1} parent=5 // pred_region
        %s492 = ssub.s32 %s30, 1
        // Predicated region
        $region65: #{tpu_custom_call.1} parent=63 // pred_check
          %p493 = pneg %p51
        $region66: #{tpu_custom_call.1} parent=63 // pred_check_branch
          %495 = sbr.rel (%p493) target = $region68
        $region67: #{tpu_custom_call.1} parent=63 // pred_region
          %496 = dma.done [#allocation4], 2048
        $region68: #{tpu_custom_call.1} parent=63 // pred_fallthru
          _
        // Predicated region
        $region69: #{tpu_custom_call.1} parent=63 // pred_check
          %p497 = pneg %p72
        $region70: #{tpu_custom_call.1} parent=63 // pred_check_branch
          %499 = sbr.rel (%p497) target = $region72
        $region71: #{tpu_custom_call.1} parent=63 // pred_region
          %500 = dma.done [#allocation7], 2048
        $region72: #{tpu_custom_call.1} parent=63 // pred_fallthru
          _
        // Predicated region
        $region73: #{tpu_custom_call.1} parent=63 // pred_check
          %p501 = pneg %p156
        $region74: #{tpu_custom_call.1} parent=63 // pred_check_branch
          %503 = sbr.rel (%p501) target = $region76
        $region75: #{tpu_custom_call.1} parent=63 // pred_region
          %504 = dma.done [#allocation7], 1024
        $region76: #{tpu_custom_call.1} parent=63 // pred_fallthru
          _
        %s505 = sand.u32 %s232, 1
        %s506 = scalar_lea.sflag [#allocation10], %s505
        %s507 = sand.u32 %s232, 1
        %s508 = smul.addr %s507, 128
        %s509 = scalar_lea.vmem [#allocation9], %s508
        // Predicated region
        $region77: #{tpu_custom_call.1} parent=63 // pred_check
          %p510 = pneg %p245
        $region78: #{tpu_custom_call.1} parent=63 // pred_check_branch
          %512 = sbr.rel (%p510) target = $region80
        $region79: #{tpu_custom_call.1} parent=63 // pred_region
          %513 = dma.done %s506, 2048
        $region80: #{tpu_custom_call.1} parent=63 // pred_fallthru
          _
        %p514 = pneg %p51
        %p515 = pneg %p48
        %p516 = pneg %p72
        %p517 = pneg %p69
        %p518 = pneg %p93
        %p519 = pneg %p90
        %p520 = pneg %p114
        %p521 = pneg %p111
        %p522 = pneg %p135
        %p523 = pneg %p132
        %p524 = pneg %p156
        %p525 = pneg %p153
        %p526 = pneg %p177
        %p527 = pneg %p174
        %p528 = pneg %p198
        %p529 = pneg %p195
        %p530 = pneg %p219
        %p531 = pneg %p216
        %s532 = sand.u32 %s232, 1
        %s533 = scalar_lea.sflag [#allocation10], %s532
        %s534 = sand.u32 %s232, 1
        %s535 = smul.addr %s534, 128
        %s536 = scalar_lea.vmem [#allocation9], %s535
        %p537 = pneg %p245
        %p538 = pneg %p242
        %s539 = smul.u32 2, %s35
        %p540 = scmp.lt.s32.totalorder %s539, 3
        %s541 = scalar_select %p540, %s539, 3
        %s542 = scalar_lea.vmem %s10, %s541
        %p543 = pneg %p271
        %p544 = pneg %p268
        %p545 = pneg %p297
        %p546 = pneg %p294
        %s547 = sand.u32 %s284, 1
        %s548 = scalar_lea.sflag [#allocation5], %s547
        %s549 = sand.u32 %s284, 1
        %s550 = smul.addr %s549, 128
        %s551 = scalar_lea.vmem [#allocation11], %s550
        %p552 = pneg %p318
        %p553 = pneg %p315
        %p554 = pneg %p339
        %p555 = pneg %p336
        %p556 = pneg %p360
        %p557 = pneg %p357
        %p558 = pneg %p381
        %p559 = pneg %p378
        %s560 = smul.u32 2, %s35
        %s561 = smul.u32 2, %s35
        %p562 = scmp.lt.s32.totalorder %s561, 3
        %s563 = scalar_select %p562, %s561, 3
        %s564 = scalar_lea.vmem %s10, %s563
        %s565 = smul.u32 2, %s35
        %s566 = smul.u32 2, %s35
        %p568 = scmp.eq.s32.totalorder %s35, 0
        // Predicated region
        $region81: #{tpu_custom_call.1} parent=63 // pred_check
          %p569 = pneg %p568
        $region82: #{tpu_custom_call.1} parent=63 // pred_check_branch
          %571 = sbr.rel (%p569) target = $region84
        $region83: #{tpu_custom_call.1} parent=63 // pred_region
          %v572 = vld [vmem:[#allocation3] sm:$0xff]
          %v573 = vld [vmem:[#allocation3 + $0x8] sm:$0xff]
          %v574 = vld [vmem:[#allocation3 + $0x10] sm:$0xff]
          %v575 = vld [vmem:[#allocation3 + $0x18] sm:$0xff]
          %v576 = vld [vmem:[#allocation3 + $0x20] sm:$0xff]
          %v577 = vld [vmem:[#allocation3 + $0x28] sm:$0xff]
          %v578 = vld [vmem:[#allocation3 + $0x30] sm:$0xff]
          %v579 = vld [vmem:[#allocation3 + $0x38] sm:$0xff]
          %v580 = vld [vmem:[#allocation3 + $0x40] sm:$0xff]
          %v581 = vld [vmem:[#allocation3 + $0x48] sm:$0xff]
          %v582 = vld [vmem:[#allocation3 + $0x50] sm:$0xff]
          %v583 = vld [vmem:[#allocation3 + $0x58] sm:$0xff]
          %v584 = vld [vmem:[#allocation3 + $0x60] sm:$0xff]
          %v585 = vld [vmem:[#allocation3 + $0x68] sm:$0xff]
          %v586 = vld [vmem:[#allocation3 + $0x70] sm:$0xff]
          %v587 = vld [vmem:[#allocation3 + $0x78] sm:$0xff]
          %v588 = vpack.c.bf16 %v574, %v572
          %v589 = vpack.c.bf16 %v575, %v573
          %v590 = vpack.c.bf16 %v578, %v576
          %v591 = vpack.c.bf16 %v579, %v577
          %v592 = vpack.c.bf16 %v582, %v580
          %v593 = vpack.c.bf16 %v583, %v581
          %v594 = vpack.c.bf16 %v586, %v584
          %v595 = vpack.c.bf16 %v587, %v585
          %v596 = vld [vmem:[#allocation6] sm:$0xf]
          %v597 = vld [vmem:[#allocation6 + $0x4] sm:$0xf]
          %v598 = vld [vmem:[#allocation6 + $0x8] sm:$0xf]
          %v599 = vld [vmem:[#allocation6 + $0xc] sm:$0xf]
          %v600 = vld [vmem:[#allocation6 + $0x10] sm:$0xf]
          %v601 = vld [vmem:[#allocation6 + $0x14] sm:$0xf]
          %v602 = vld [vmem:[#allocation6 + $0x18] sm:$0xf]
          %v603 = vld [vmem:[#allocation6 + $0x1c] sm:$0xf]
          %v604 = vld [vmem:[#allocation6 + $0x20] sm:$0xf]
          %v605 = vld [vmem:[#allocation6 + $0x24] sm:$0xf]
          %v606 = vld [vmem:[#allocation6 + $0x28] sm:$0xf]
          %v607 = vld [vmem:[#allocation6 + $0x2c] sm:$0xf]
          %v608 = vld [vmem:[#allocation6 + $0x30] sm:$0xf]
          %v609 = vld [vmem:[#allocation6 + $0x34] sm:$0xf]
          %v610 = vld [vmem:[#allocation6 + $0x38] sm:$0xf]
          %v611 = vld [vmem:[#allocation6 + $0x3c] sm:$0xf]
          %v612 = vld [vmem:[#allocation6 + $0x40] sm:$0xf]
          %v613 = vld [vmem:[#allocation6 + $0x44] sm:$0xf]
          %v614 = vld [vmem:[#allocation6 + $0x48] sm:$0xf]
          %v615 = vld [vmem:[#allocation6 + $0x4c] sm:$0xf]
          %v616 = vld [vmem:[#allocation6 + $0x50] sm:$0xf]
          %v617 = vld [vmem:[#allocation6 + $0x54] sm:$0xf]
          %v618 = vld [vmem:[#allocation6 + $0x58] sm:$0xf]
          %v619 = vld [vmem:[#allocation6 + $0x5c] sm:$0xf]
          %v620 = vld [vmem:[#allocation6 + $0x60] sm:$0xf]
          %v621 = vld [vmem:[#allocation6 + $0x64] sm:$0xf]
          %v622 = vld [vmem:[#allocation6 + $0x68] sm:$0xf]
          %v623 = vld [vmem:[#allocation6 + $0x6c] sm:$0xf]
          %v624 = vld [vmem:[#allocation6 + $0x70] sm:$0xf]
          %v625 = vld [vmem:[#allocation6 + $0x74] sm:$0xf]
          %v626 = vld [vmem:[#allocation6 + $0x78] sm:$0xf]
          %v627 = vld [vmem:[#allocation6 + $0x7c] sm:$0xf]
          %v628 = vld [vmem:[%s2] sm:$0x1]
          %v630 = vlaneseq
          %v631 = vshrl.u32 %v630, 7
          %v632 = vsub.s32 0, %v631
          %v633 = vrot.slane %v628, %v632
          %v667 = vunpack.c.l.b16 %v596
          %v668 = vunpack.c.l.b16 %v597
          %v669 = vunpack.c.l.b16 %v598
          %v670 = vunpack.c.l.b16 %v599
          %v671 = vunpack.c.l.b16 %v600
          %v672 = vunpack.c.l.b16 %v601
          %v673 = vunpack.c.l.b16 %v602
          %v674 = vunpack.c.l.b16 %v603
          %v675 = vunpack.c.l.b16 %v604
          %v676 = vunpack.c.l.b16 %v605
          %v677 = vunpack.c.l.b16 %v606
          %v678 = vunpack.c.l.b16 %v607
          %v679 = vunpack.c.l.b16 %v608
          %v680 = vunpack.c.l.b16 %v609
          %v681 = vunpack.c.l.b16 %v610
          %v682 = vunpack.c.l.b16 %v611
          %v683 = vunpack.c.l.b16 %v612
          %v684 = vunpack.c.l.b16 %v613
          %v685 = vunpack.c.l.b16 %v614
          %v686 = vunpack.c.l.b16 %v615
          %v687 = vunpack.c.l.b16 %v616
          %v688 = vunpack.c.l.b16 %v617
          %v689 = vunpack.c.l.b16 %v618
          %v690 = vunpack.c.l.b16 %v619
          %v691 = vunpack.c.l.b16 %v620
          %v692 = vunpack.c.l.b16 %v621
          %v693 = vunpack.c.l.b16 %v622
          %v694 = vunpack.c.l.b16 %v623
          %v695 = vunpack.c.l.b16 %v624
          %v696 = vunpack.c.l.b16 %v625
          %v697 = vunpack.c.l.b16 %v626
          %v698 = vunpack.c.l.b16 %v627
          %v699 = vpack.c.b16 %v668, %v667
          %v700 = vpack.c.b16 %v670, %v669
          %v701 = vpack.c.b16 %v672, %v671
          %v702 = vpack.c.b16 %v674, %v673
          %v703 = vpack.c.b16 %v676, %v675
          %v704 = vpack.c.b16 %v678, %v677
          %v705 = vpack.c.b16 %v680, %v679
          %v706 = vpack.c.b16 %v682, %v681
          %v707 = vpack.c.b16 %v684, %v683
          %v708 = vpack.c.b16 %v686, %v685
          %v709 = vpack.c.b16 %v688, %v687
          %v710 = vpack.c.b16 %v690, %v689
          %v711 = vpack.c.b16 %v692, %v691
          %v712 = vpack.c.b16 %v694, %v693
          %v713 = vpack.c.b16 %v696, %v695
          %v714 = vpack.c.b16 %v698, %v697
          %731 = vmatprep.subr.bf16.mxu0 0
          %732 = vmatpush1.bf16.msra.mxu0 %v699
          %733 = vmatprep.subr.bf16.mxu0 0
          %734 = vmatpush1.bf16.msra.mxu0 %v700
          %735 = vmatprep.subr.bf16.mxu0 0
          %736 = vmatpush1.bf16.msra.mxu0 %v701
          %737 = vmatprep.subr.bf16.mxu0 0
          %738 = vmatpush1.bf16.msra.mxu0 %v702
          %739 = vmatprep.subr.bf16.mxu0 0
          %740 = vmatpush1.bf16.msra.mxu0 %v703
          %741 = vmatprep.subr.bf16.mxu0 0
          %742 = vmatpush1.bf16.msra.mxu0 %v704
          %743 = vmatprep.subr.bf16.mxu0 0
          %744 = vmatpush1.bf16.msra.mxu0 %v705
          %745 = vmatprep.subr.bf16.mxu0 0
          %746 = vmatpush1.bf16.msra.mxu0 %v706
          %747 = vmatprep.subr.bf16.mxu0 0
          %748 = vmatpush1.bf16.msra.mxu0 %v707
          %749 = vmatprep.subr.bf16.mxu0 0
          %750 = vmatpush1.bf16.msra.mxu0 %v708
          %751 = vmatprep.subr.bf16.mxu0 0
          %752 = vmatpush1.bf16.msra.mxu0 %v709
          %753 = vmatprep.subr.bf16.mxu0 0
          %754 = vmatpush1.bf16.msra.mxu0 %v710
          %755 = vmatprep.subr.bf16.mxu0 0
          %756 = vmatpush1.bf16.msra.mxu0 %v711
          %757 = vmatprep.subr.bf16.mxu0 0
          %758 = vmatpush1.bf16.msra.mxu0 %v712
          %759 = vmatprep.subr.bf16.mxu0 0
          %760 = vmatpush1.bf16.msra.mxu0 %v713
          %761 = vmatprep.subr.bf16.mxu0 0
          %762 = vmatpush1.bf16.msra.mxu0 %v714
          %763 = vmatprep.mubr.bf16.mxu0 %v589
          %764 = vmatmul.mubr.bf16.gmra.mrb[0].mxu0 %v588
          %v765 = vpop.f32.mrb[0].mxu0
          %v766 = vadd.f32 %v633, %v765
          %v767 = vpop.f32.mrb[0].mxu0
          %v768 = vpop.f32.mrb[0].mxu0
          %v769 = vadd.f32 %v633, %v768
          %v770 = vpop.f32.mrb[0].mxu0
          %771 = vmatprep.mubr.bf16.mxu0 %v591
          %772 = vmatmul.mubr.bf16.gmra.mrb[0].mxu0 %v590
          %v773 = vpop.f32.mrb[0].mxu0
          %v774 = vadd.f32 %v633, %v773
          %v775 = vpop.f32.mrb[0].mxu0
          %v776 = vpop.f32.mrb[0].mxu0
          %v777 = vadd.f32 %v633, %v776
          %v778 = vpop.f32.mrb[0].mxu0
          %779 = vmatprep.mubr.bf16.mxu0 %v593
          %780 = vmatmul.mubr.bf16.gmra.mrb[0].mxu0 %v592
          %v781 = vpop.f32.mrb[0].mxu0
          %v782 = vadd.f32 %v633, %v781
          %v783 = vpop.f32.mrb[0].mxu0
          %v784 = vpop.f32.mrb[0].mxu0
          %v785 = vadd.f32 %v633, %v784
          %v786 = vpop.f32.mrb[0].mxu0
          %787 = vmatprep.mubr.bf16.mxu0 %v595
          %788 = vmatmul.mubr.bf16.gmra.mrb[0].mxu0 %v594
          %v789 = vpop.f32.mrb[0].mxu0
          %v790 = vadd.f32 %v633, %v789
          %v791 = vpop.f32.mrb[0].mxu0
          %v792 = vpop.f32.mrb[0].mxu0
          %v793 = vadd.f32 %v633, %v792
          %v794 = vpop.f32.mrb[0].mxu0
          %795 = vdwg.mxu0
          %796 = vadd.xlane.f32.xlu0 %v766
          %v797 = vpop.xlane.xlu0 %796
          %798 = vadd.xlane.f32.xlu0 %v769
          %v799 = vpop.xlane.xlu0 %798
          %800 = vadd.xlane.f32.xlu0 %v774
          %v801 = vpop.xlane.xlu0 %800
          %802 = vadd.xlane.f32.xlu0 %v777
          %v803 = vpop.xlane.xlu0 %802
          %804 = vadd.xlane.f32.xlu0 %v782
          %v805 = vpop.xlane.xlu0 %804
          %806 = vadd.xlane.f32.xlu0 %v785
          %v807 = vpop.xlane.xlu0 %806
          %808 = vadd.xlane.f32.xlu0 %v790
          %v809 = vpop.xlane.xlu0 %808
          %810 = vadd.xlane.f32.xlu0 %v793
          %v811 = vpop.xlane.xlu0 %810
          %v812 = vrcp.pop 128.0
          %v813 = vmul.f32 %v797, %v812
          %v814 = vmul.f32 %v799, %v812
          %v815 = vmul.f32 %v801, %v812
          %v816 = vmul.f32 %v803, %v812
          %v817 = vmul.f32 %v805, %v812
          %v818 = vmul.f32 %v807, %v812
          %v819 = vmul.f32 %v809, %v812
          %v820 = vmul.f32 %v811, %v812
          %v821 = vmul.f32 %v766, %v766
          %v822 = vmul.f32 %v769, %v769
          %v823 = vmul.f32 %v774, %v774
          %v824 = vmul.f32 %v777, %v777
          %v825 = vmul.f32 %v782, %v782
          %v826 = vmul.f32 %v785, %v785
          %v827 = vmul.f32 %v790, %v790
          %v828 = vmul.f32 %v793, %v793
          %829 = vadd.xlane.f32.xlu0 %v821
          %v830 = vpop.xlane.xlu0 %829
          %831 = vadd.xlane.f32.xlu0 %v822
          %v832 = vpop.xlane.xlu0 %831
          %833 = vadd.xlane.f32.xlu0 %v823
          %v834 = vpop.xlane.xlu0 %833
          %835 = vadd.xlane.f32.xlu0 %v824
          %v836 = vpop.xlane.xlu0 %835
          %837 = vadd.xlane.f32.xlu0 %v825
          %v838 = vpop.xlane.xlu0 %837
          %839 = vadd.xlane.f32.xlu0 %v826
          %v840 = vpop.xlane.xlu0 %839
          %841 = vadd.xlane.f32.xlu0 %v827
          %v842 = vpop.xlane.xlu0 %841
          %843 = vadd.xlane.f32.xlu0 %v828
          %v844 = vpop.xlane.xlu0 %843
          %v845 = vmul.f32 %v830, %v812
          %v846 = vmul.f32 %v832, %v812
          %v847 = vmul.f32 %v834, %v812
          %v848 = vmul.f32 %v836, %v812
          %v849 = vmul.f32 %v838, %v812
          %v850 = vmul.f32 %v840, %v812
          %v851 = vmul.f32 %v842, %v812
          %v852 = vmul.f32 %v844, %v812
          %v853 = vmul.f32 %v813, %v813
          %v854 = vmul.f32 %v814, %v814
          %v855 = vmul.f32 %v815, %v815
          %v856 = vmul.f32 %v816, %v816
          %v857 = vmul.f32 %v817, %v817
          %v858 = vmul.f32 %v818, %v818
          %v859 = vmul.f32 %v819, %v819
          %v860 = vmul.f32 %v820, %v820
          %v861 = vsub.f32 %v845, %v853
          %v862 = vsub.f32 %v846, %v854
          %v863 = vsub.f32 %v847, %v855
          %v864 = vsub.f32 %v848, %v856
          %v865 = vsub.f32 %v849, %v857
          %v866 = vsub.f32 %v850, %v858
          %v867 = vsub.f32 %v851, %v859
          %v868 = vsub.f32 %v852, %v860
          %v869 = vsub.f32 %v766, %v813
          %v870 = vsub.f32 %v769, %v814
          %v871 = vsub.f32 %v774, %v815
          %v872 = vsub.f32 %v777, %v816
          %v873 = vsub.f32 %v782, %v817
          %v874 = vsub.f32 %v785, %v818
          %v875 = vsub.f32 %v790, %v819
          %v876 = vsub.f32 %v793, %v820
          %v877 = vadd.f32 %v861, 1e-05
          %v878 = vadd.f32 %v862, 1e-05
          %v879 = vadd.f32 %v863, 1e-05
          %v880 = vadd.f32 %v864, 1e-05
          %v881 = vadd.f32 %v865, 1e-05
          %v882 = vadd.f32 %v866, 1e-05
          %v883 = vadd.f32 %v867, 1e-05
          %v884 = vadd.f32 %v868, 1e-05
          %v885 = vrsqrt.pop %v877
          %v886 = vrsqrt.pop %v878
          %v887 = vrsqrt.pop %v879
          %v888 = vrsqrt.pop %v880
          %v889 = vrsqrt.pop %v881
          %v890 = vrsqrt.pop %v882
          %v891 = vrsqrt.pop %v883
          %v892 = vrsqrt.pop %v884
          %v893 = vmul.f32 %v869, %v885
          %v894 = vmul.f32 %v870, %v886
          %v895 = vmul.f32 %v871, %v887
          %v896 = vmul.f32 %v872, %v888
          %v897 = vmul.f32 %v873, %v889
          %v898 = vmul.f32 %v874, %v890
          %v899 = vmul.f32 %v875, %v891
          %v900 = vmul.f32 %v876, %v892
          %v901 = vld [vmem:[%s3] sm:$0x1]
          %v903 = vlaneseq
          %v904 = vshrl.u32 %v903, 7
          %v905 = vsub.s32 0, %v904
          %v906 = vrot.slane %v901, %v905
          %v908 = vmul.f32 %v893, %v906
          %v909 = vmul.f32 %v894, %v906
          %v910 = vmul.f32 %v895, %v906
          %v911 = vmul.f32 %v896, %v906
          %v912 = vmul.f32 %v897, %v906
          %v913 = vmul.f32 %v898, %v906
          %v914 = vmul.f32 %v899, %v906
          %v915 = vmul.f32 %v900, %v906
          %v916 = vld [vmem:[%s4] sm:$0x1]
          %v918 = vlaneseq
          %v919 = vshrl.u32 %v918, 7
          %v920 = vsub.s32 0, %v919
          %v921 = vrot.slane %v916, %v920
          %v923 = vadd.f32 %v908, %v921
          %v924 = vadd.f32 %v909, %v921
          %v925 = vadd.f32 %v910, %v921
          %v926 = vadd.f32 %v911, %v921
          %v927 = vadd.f32 %v912, %v921
          %v928 = vadd.f32 %v913, %v921
          %v929 = vadd.f32 %v914, %v921
          %v930 = vadd.f32 %v915, %v921
          %v931 = vmax.f32 %v923, 0.0
          %v932 = vmax.f32 %v924, 0.0
          %v933 = vmax.f32 %v925, 0.0
          %v934 = vmax.f32 %v926, 0.0
          %v935 = vmax.f32 %v927, 0.0
          %v936 = vmax.f32 %v928, 0.0
          %v937 = vmax.f32 %v929, 0.0
          %v938 = vmax.f32 %v930, 0.0
          %v939 = vpack.c.bf16 %v932, %v931
          %v940 = vpack.c.bf16 %v934, %v933
          %v941 = vpack.c.bf16 %v936, %v935
          %v942 = vpack.c.bf16 %v938, %v937
          %v943 = vld [vmem:[#allocation8] sm:$0xf]
          %v944 = vld [vmem:[#allocation8 + $0x4] sm:$0xf]
          %v945 = vld [vmem:[#allocation8 + $0x8] sm:$0xf]
          %v946 = vld [vmem:[#allocation8 + $0xc] sm:$0xf]
          %v947 = vld [vmem:[#allocation8 + $0x10] sm:$0xf]
          %v948 = vld [vmem:[#allocation8 + $0x14] sm:$0xf]
          %v949 = vld [vmem:[#allocation8 + $0x18] sm:$0xf]
          %v950 = vld [vmem:[#allocation8 + $0x1c] sm:$0xf]
          %v951 = vld [vmem:[#allocation8 + $0x20] sm:$0xf]
          %v952 = vld [vmem:[#allocation8 + $0x24] sm:$0xf]
          %v953 = vld [vmem:[#allocation8 + $0x28] sm:$0xf]
          %v954 = vld [vmem:[#allocation8 + $0x2c] sm:$0xf]
          %v955 = vld [vmem:[#allocation8 + $0x30] sm:$0xf]
          %v956 = vld [vmem:[#allocation8 + $0x34] sm:$0xf]
          %v957 = vld [vmem:[#allocation8 + $0x38] sm:$0xf]
          %v958 = vld [vmem:[#allocation8 + $0x3c] sm:$0xf]
          %v959 = vld [vmem:[%s6] sm:$0x1]
          %v961 = vlaneseq
          %v962 = vshrl.u32 %v961, 7
          %v963 = vsub.s32 0, %v962
          %v964 = vrot.slane %v959, %v963
          %v982 = vunpack.c.l.b16 %v943
          %v983 = vunpack.c.l.b16 %v944
          %v984 = vunpack.c.l.b16 %v945
          %v985 = vunpack.c.l.b16 %v946
          %v986 = vunpack.c.l.b16 %v947
          %v987 = vunpack.c.l.b16 %v948
          %v988 = vunpack.c.l.b16 %v949
          %v989 = vunpack.c.l.b16 %v950
          %v990 = vunpack.c.l.b16 %v951
          %v991 = vunpack.c.l.b16 %v952
          %v992 = vunpack.c.l.b16 %v953
          %v993 = vunpack.c.l.b16 %v954
          %v994 = vunpack.c.l.b16 %v955
          %v995 = vunpack.c.l.b16 %v956
          %v996 = vunpack.c.l.b16 %v957
          %v997 = vunpack.c.l.b16 %v958
          %v998 = vpack.c.b16 %v983, %v982
          %v999 = vpack.c.b16 %v985, %v984
          %v1000 = vpack.c.b16 %v987, %v986
          %v1001 = vpack.c.b16 %v989, %v988
          %v1002 = vpack.c.b16 %v991, %v990
          %v1003 = vpack.c.b16 %v993, %v992
          %v1004 = vpack.c.b16 %v995, %v994
          %v1005 = vpack.c.b16 %v997, %v996
          %1014 = vmatprep.subr.bf16.mxu0 0
          %1015 = vmatpush1.bf16.msra.mxu0 %v998
          %1016 = vmatprep.subr.bf16.mxu0 0
          %1017 = vmatpush1.bf16.msra.mxu0 %v999
          %1018 = vmatprep.subr.bf16.mxu0 0
          %1019 = vmatpush1.bf16.msra.mxu0 %v1000
          %1020 = vmatprep.subr.bf16.mxu0 0
          %1021 = vmatpush1.bf16.msra.mxu0 %v1001
          %1022 = vmatprep.subr.bf16.mxu0 0
          %1023 = vmatpush1.bf16.msra.mxu0 %v1002
          %1024 = vmatprep.subr.bf16.mxu0 0
          %1025 = vmatpush1.bf16.msra.mxu0 %v1003
          %1026 = vmatprep.subr.bf16.mxu0 0
          %1027 = vmatpush1.bf16.msra.mxu0 %v1004
          %1028 = vmatprep.subr.bf16.mxu0 0
          %1029 = vmatpush1.bf16.msra.mxu0 %v1005
          %1030 = vmatprep.subr.bf16.mxu0 0
          %1031 = vmatpush1.bf16.msra.mxu0 0
          %1032 = vmatprep.subr.bf16.mxu0 0
          %1033 = vmatpush1.bf16.msra.mxu0 0
          %1034 = vmatprep.subr.bf16.mxu0 0
          %1035 = vmatpush1.bf16.msra.mxu0 0
          %1036 = vmatprep.subr.bf16.mxu0 0
          %1037 = vmatpush1.bf16.msra.mxu0 0
          %1038 = vmatprep.subr.bf16.mxu0 0
          %1039 = vmatpush1.bf16.msra.mxu0 0
          %1040 = vmatprep.subr.bf16.mxu0 0
          %1041 = vmatpush1.bf16.msra.mxu0 0
          %1042 = vmatprep.subr.bf16.mxu0 0
          %1043 = vmatpush1.bf16.msra.mxu0 0
          %1044 = vmatprep.subr.bf16.mxu0 0
          %1045 = vmatpush1.bf16.msra.mxu0 0
          %1046 = vmatprep.mubr.bf16.mxu0 0
          %1047 = vmatmul.mubr.bf16.gmra.mrb[0].mxu0 %v939
          %v1048 = vpop.f32.mrb[0].mxu0
          %v1049 = vadd.f32 %v964, %v1048
          %v1050 = vpop.f32.mrb[0].mxu0
          %v1051 = vpop.f32.mrb[0].mxu0
          %v1052 = vadd.f32 %v964, %v1051
          %v1053 = vpop.f32.mrb[0].mxu0
          %1054 = vmatprep.mubr.bf16.mxu0 0
          %1055 = vmatmul.mubr.bf16.gmra.mrb[0].mxu0 %v940
          %v1056 = vpop.f32.mrb[0].mxu0
          %v1057 = vadd.f32 %v964, %v1056
          %v1058 = vpop.f32.mrb[0].mxu0
          %v1059 = vpop.f32.mrb[0].mxu0
          %v1060 = vadd.f32 %v964, %v1059
          %v1061 = vpop.f32.mrb[0].mxu0
          %1062 = vmatprep.mubr.bf16.mxu0 0
          %1063 = vmatmul.mubr.bf16.gmra.mrb[0].mxu0 %v941
          %v1064 = vpop.f32.mrb[0].mxu0
          %v1065 = vadd.f32 %v964, %v1064
          %v1066 = vpop.f32.mrb[0].mxu0
          %v1067 = vpop.f32.mrb[0].mxu0
          %v1068 = vadd.f32 %v964, %v1067
          %v1069 = vpop.f32.mrb[0].mxu0
          %1070 = vmatprep.mubr.bf16.mxu0 0
          %1071 = vmatmul.mubr.bf16.gmra.mrb[0].mxu0 %v942
          %v1072 = vpop.f32.mrb[0].mxu0
          %v1073 = vadd.f32 %v964, %v1072
          %v1074 = vpop.f32.mrb[0].mxu0
          %v1075 = vpop.f32.mrb[0].mxu0
          %v1076 = vadd.f32 %v964, %v1075
          %v1077 = vpop.f32.mrb[0].mxu0
          %1078 = vdwg.mxu0
          %1079 = vadd.xlane.f32.xlu0 %v1049
          %v1080 = vpop.xlane.xlu0 %1079
          %1081 = vadd.xlane.f32.xlu0 %v1052
          %v1082 = vpop.xlane.xlu0 %1081
          %1083 = vadd.xlane.f32.xlu0 %v1057
          %v1084 = vpop.xlane.xlu0 %1083
          %1085 = vadd.xlane.f32.xlu0 %v1060
          %v1086 = vpop.xlane.xlu0 %1085
          %1087 = vadd.xlane.f32.xlu0 %v1065
          %v1088 = vpop.xlane.xlu0 %1087
          %1089 = vadd.xlane.f32.xlu0 %v1068
          %v1090 = vpop.xlane.xlu0 %1089
          %1091 = vadd.xlane.f32.xlu0 %v1073
          %v1092 = vpop.xlane.xlu0 %1091
          %1093 = vadd.xlane.f32.xlu0 %v1076
          %v1094 = vpop.xlane.xlu0 %1093
          %v1095 = vmul.f32 %v1080, %v812
          %v1096 = vmul.f32 %v1082, %v812
          %v1097 = vmul.f32 %v1084, %v812
          %v1098 = vmul.f32 %v1086, %v812
          %v1099 = vmul.f32 %v1088, %v812
          %v1100 = vmul.f32 %v1090, %v812
          %v1101 = vmul.f32 %v1092, %v812
          %v1102 = vmul.f32 %v1094, %v812
          %v1103 = vmul.f32 %v1049, %v1049
          %v1104 = vmul.f32 %v1052, %v1052
          %v1105 = vmul.f32 %v1057, %v1057
          %v1106 = vmul.f32 %v1060, %v1060
          %v1107 = vmul.f32 %v1065, %v1065
          %v1108 = vmul.f32 %v1068, %v1068
          %v1109 = vmul.f32 %v1073, %v1073
          %v1110 = vmul.f32 %v1076, %v1076
          %1111 = vadd.xlane.f32.xlu0 %v1103
          %v1112 = vpop.xlane.xlu0 %1111
          %1113 = vadd.xlane.f32.xlu0 %v1104
          %v1114 = vpop.xlane.xlu0 %1113
          %1115 = vadd.xlane.f32.xlu0 %v1105
          %v1116 = vpop.xlane.xlu0 %1115
          %1117 = vadd.xlane.f32.xlu0 %v1106
          %v1118 = vpop.xlane.xlu0 %1117
          %1119 = vadd.xlane.f32.xlu0 %v1107
          %v1120 = vpop.xlane.xlu0 %1119
          %1121 = vadd.xlane.f32.xlu0 %v1108
          %v1122 = vpop.xlane.xlu0 %1121
          %1123 = vadd.xlane.f32.xlu0 %v1109
          %v1124 = vpop.xlane.xlu0 %1123
          %1125 = vadd.xlane.f32.xlu0 %v1110
          %v1126 = vpop.xlane.xlu0 %1125
          %v1127 = vmul.f32 %v1112, %v812
          %v1128 = vmul.f32 %v1114, %v812
          %v1129 = vmul.f32 %v1116, %v812
          %v1130 = vmul.f32 %v1118, %v812
          %v1131 = vmul.f32 %v1120, %v812
          %v1132 = vmul.f32 %v1122, %v812
          %v1133 = vmul.f32 %v1124, %v812
          %v1134 = vmul.f32 %v1126, %v812
          %v1135 = vmul.f32 %v1095, %v1095
          %v1136 = vmul.f32 %v1096, %v1096
          %v1137 = vmul.f32 %v1097, %v1097
          %v1138 = vmul.f32 %v1098, %v1098
          %v1139 = vmul.f32 %v1099, %v1099
          %v1140 = vmul.f32 %v1100, %v1100
          %v1141 = vmul.f32 %v1101, %v1101
          %v1142 = vmul.f32 %v1102, %v1102
          %v1143 = vsub.f32 %v1127, %v1135
          %v1144 = vsub.f32 %v1128, %v1136
          %v1145 = vsub.f32 %v1129, %v1137
          %v1146 = vsub.f32 %v1130, %v1138
          %v1147 = vsub.f32 %v1131, %v1139
          %v1148 = vsub.f32 %v1132, %v1140
          %v1149 = vsub.f32 %v1133, %v1141
          %v1150 = vsub.f32 %v1134, %v1142
          %v1151 = vsub.f32 %v1049, %v1095
          %v1152 = vsub.f32 %v1052, %v1096
          %v1153 = vsub.f32 %v1057, %v1097
          %v1154 = vsub.f32 %v1060, %v1098
          %v1155 = vsub.f32 %v1065, %v1099
          %v1156 = vsub.f32 %v1068, %v1100
          %v1157 = vsub.f32 %v1073, %v1101
          %v1158 = vsub.f32 %v1076, %v1102
          %v1159 = vadd.f32 %v1143, 1e-05
          %v1160 = vadd.f32 %v1144, 1e-05
          %v1161 = vadd.f32 %v1145, 1e-05
          %v1162 = vadd.f32 %v1146, 1e-05
          %v1163 = vadd.f32 %v1147, 1e-05
          %v1164 = vadd.f32 %v1148, 1e-05
          %v1165 = vadd.f32 %v1149, 1e-05
          %v1166 = vadd.f32 %v1150, 1e-05
          %v1167 = vrsqrt.pop %v1159
          %v1168 = vrsqrt.pop %v1160
          %v1169 = vrsqrt.pop %v1161
          %v1170 = vrsqrt.pop %v1162
          %v1171 = vrsqrt.pop %v1163
          %v1172 = vrsqrt.pop %v1164
          %v1173 = vrsqrt.pop %v1165
          %v1174 = vrsqrt.pop %v1166
          %v1175 = vmul.f32 %v1151, %v1167
          %v1176 = vmul.f32 %v1152, %v1168
          %v1177 = vmul.f32 %v1153, %v1169
          %v1178 = vmul.f32 %v1154, %v1170
          %v1179 = vmul.f32 %v1155, %v1171
          %v1180 = vmul.f32 %v1156, %v1172
          %v1181 = vmul.f32 %v1157, %v1173
          %v1182 = vmul.f32 %v1158, %v1174
          %v1183 = vld [vmem:[%s7] sm:$0x1]
          %v1185 = vlaneseq
          %v1186 = vshrl.u32 %v1185, 7
          %v1187 = vsub.s32 0, %v1186
          %v1188 = vrot.slane %v1183, %v1187
          %v1190 = vmul.f32 %v1175, %v1188
          %v1191 = vmul.f32 %v1176, %v1188
          %v1192 = vmul.f32 %v1177, %v1188
          %v1193 = vmul.f32 %v1178, %v1188
          %v1194 = vmul.f32 %v1179, %v1188
          %v1195 = vmul.f32 %v1180, %v1188
          %v1196 = vmul.f32 %v1181, %v1188
          %v1197 = vmul.f32 %v1182, %v1188
          %v1198 = vld [vmem:[%s8] sm:$0x1]
          %v1200 = vlaneseq
          %v1201 = vshrl.u32 %v1200, 7
          %v1202 = vsub.s32 0, %v1201
          %v1203 = vrot.slane %v1198, %v1202
          %v1205 = vadd.f32 %v1190, %v1203
          %v1206 = vadd.f32 %v1191, %v1203
          %v1207 = vadd.f32 %v1192, %v1203
          %v1208 = vadd.f32 %v1193, %v1203
          %v1209 = vadd.f32 %v1194, %v1203
          %v1210 = vadd.f32 %v1195, %v1203
          %v1211 = vadd.f32 %v1196, %v1203
          %v1212 = vadd.f32 %v1197, %v1203
          %v1213 = vmax.f32 %v1205, 0.0
          %v1214 = vmax.f32 %v1206, 0.0
          %v1215 = vmax.f32 %v1207, 0.0
          %v1216 = vmax.f32 %v1208, 0.0
          %v1217 = vmax.f32 %v1209, 0.0
          %v1218 = vmax.f32 %v1210, 0.0
          %v1219 = vmax.f32 %v1211, 0.0
          %v1220 = vmax.f32 %v1212, 0.0
          %v1221 = vpack.c.bf16 %v1214, %v1213
          %v1222 = vpack.c.bf16 %v1216, %v1215
          %v1223 = vpack.c.bf16 %v1218, %v1217
          %v1224 = vpack.c.bf16 %v1220, %v1219
          %1225 = vst [vmem:[#allocation2] sm:$0xff] %v1221
          %1226 = vst [vmem:[#allocation2 + $0x8] sm:$0xff] %v1222
          %1227 = vst [vmem:[#allocation2 + $0x10] sm:$0xff] %v1223
          %1228 = vst [vmem:[#allocation2 + $0x18] sm:$0xff] %v1224
          %vm1229 = vcmask 7168
          %1230 = vst.msk [vmem:[%s12] sm:$0xff] %vm1229, 0.0
          %1231 = vst.msk [vmem:[%s12 + $0x8] sm:$0xff] %vm1229, 0.0
          %1232 = vst.msk [vmem:[%s12 + $0x10] sm:$0xff] %vm1229, 0.0
          %1233 = vst.msk [vmem:[%s12 + $0x18] sm:$0xff] %vm1229, 0.0
          %1234 = vst.msk [vmem:[%s12 + $0x20] sm:$0xff] %vm1229, 0.0
          %1235 = vst.msk [vmem:[%s12 + $0x28] sm:$0xff] %vm1229, 0.0
          %1236 = vst.msk [vmem:[%s12 + $0x30] sm:$0xff] %vm1229, 0.0
          %1237 = vst.msk [vmem:[%s12 + $0x38] sm:$0xff] %vm1229, 0.0
          %1238 = vst.msk [vmem:[%s13] sm:$0xff] %vm1229, 0.0
          %1239 = vst.msk [vmem:[%s13 + $0x8] sm:$0xff] %vm1229, 0.0
          %1240 = vst.msk [vmem:[%s13 + $0x10] sm:$0xff] %vm1229, 0.0
          %1241 = vst.msk [vmem:[%s13 + $0x18] sm:$0xff] %vm1229, 0.0
          %1242 = vst.msk [vmem:[%s13 + $0x20] sm:$0xff] %vm1229, 0.0
          %1243 = vst.msk [vmem:[%s13 + $0x28] sm:$0xff] %vm1229, 0.0
          %1244 = vst.msk [vmem:[%s13 + $0x30] sm:$0xff] %vm1229, 0.0
          %1245 = vst.msk [vmem:[%s13 + $0x38] sm:$0xff] %vm1229, 0.0
          %1246 = vst.msk [vmem:[%s14] sm:$0xff] %vm1229, 0.0
          %1247 = vst.msk [vmem:[%s14 + $0x8] sm:$0xff] %vm1229, 0.0
          %1248 = vst.msk [vmem:[%s14 + $0x10] sm:$0xff] %vm1229, 0.0
          %1249 = vst.msk [vmem:[%s14 + $0x18] sm:$0xff] %vm1229, 0.0
          %1250 = vst.msk [vmem:[%s14 + $0x20] sm:$0xff] %vm1229, 0.0
          %1251 = vst.msk [vmem:[%s14 + $0x28] sm:$0xff] %vm1229, 0.0
          %1252 = vst.msk [vmem:[%s14 + $0x30] sm:$0xff] %vm1229, 0.0
          %1253 = vst.msk [vmem:[%s14 + $0x38] sm:$0xff] %vm1229, 0.0
          %1254 = vst.msk [vmem:[%s15] sm:$0xff] %vm1229, 0.0
          %1255 = vst.msk [vmem:[%s15 + $0x8] sm:$0xff] %vm1229, 0.0
          %1256 = vst.msk [vmem:[%s15 + $0x10] sm:$0xff] %vm1229, 0.0
          %1257 = vst.msk [vmem:[%s15 + $0x18] sm:$0xff] %vm1229, 0.0
          %1258 = vst.msk [vmem:[%s15 + $0x20] sm:$0xff] %vm1229, 0.0
          %1259 = vst.msk [vmem:[%s15 + $0x28] sm:$0xff] %vm1229, 0.0
          %1260 = vst.msk [vmem:[%s15 + $0x30] sm:$0xff] %vm1229, 0.0
          %1261 = vst.msk [vmem:[%s15 + $0x38] sm:$0xff] %vm1229, 0.0
        $region84: #{tpu_custom_call.1} parent=63 // pred_fallthru
          _
        %v1262 = vld [vmem:[#allocation2] sm:$0xff]
        %v1263 = vld [vmem:[#allocation2 + $0x8] sm:$0xff]
        %v1264 = vld [vmem:[#allocation2 + $0x10] sm:$0xff]
        %v1265 = vld [vmem:[#allocation2 + $0x18] sm:$0xff]
        %v1266 = vld [vmem:[%s509] sm:$0xff]
        %v1267 = vld [vmem:[%s509 + $0x8] sm:$0xff]
        %v1268 = vld [vmem:[%s509 + $0x10] sm:$0xff]
        %v1269 = vld [vmem:[%s509 + $0x18] sm:$0xff]
        %v1270 = vld [vmem:[%s509 + $0x20] sm:$0xff]
        %v1271 = vld [vmem:[%s509 + $0x28] sm:$0xff]
        %v1272 = vld [vmem:[%s509 + $0x30] sm:$0xff]
        %v1273 = vld [vmem:[%s509 + $0x38] sm:$0xff]
        %v1274 = vld [vmem:[%s509 + $0x40] sm:$0xff]
        %v1275 = vld [vmem:[%s509 + $0x48] sm:$0xff]
        %v1276 = vld [vmem:[%s509 + $0x50] sm:$0xff]
        %v1277 = vld [vmem:[%s509 + $0x58] sm:$0xff]
        %v1278 = vld [vmem:[%s509 + $0x60] sm:$0xff]
        %v1279 = vld [vmem:[%s509 + $0x68] sm:$0xff]
        %v1280 = vld [vmem:[%s509 + $0x70] sm:$0xff]
        %v1281 = vld [vmem:[%s509 + $0x78] sm:$0xff]
        %v1282 = vld [vmem:[%s564] sm:$0x3]
        %v1284 = vlaneseq
        %v1285 = vshrl.u32 %v1284, 7
        %v1286 = vsub.s32 0, %v1285
        %v1287 = vrot.slane %v1282, %v1286
        %v1288 = vlaneseq
        %v1289 = vshrl.u32 %v1288, 7
        %v1290 = vsub.s32 1, %v1289
        %v1291 = vrot.slane %v1282, %v1290
        %v1310 = vunpack.c.l.b16 %v1266
        %v1311 = vunpack.c.h.b16 %v1266
        %v1312 = vunpack.c.l.b16 %v1267
        %v1313 = vunpack.c.h.b16 %v1267
        %v1314 = vunpack.c.l.b16 %v1268
        %v1315 = vunpack.c.h.b16 %v1268
        %v1316 = vunpack.c.l.b16 %v1269
        %v1317 = vunpack.c.h.b16 %v1269
        %v1318 = vunpack.c.l.b16 %v1270
        %v1319 = vunpack.c.h.b16 %v1270
        %v1320 = vunpack.c.l.b16 %v1271
        %v1321 = vunpack.c.h.b16 %v1271
        %v1322 = vunpack.c.l.b16 %v1272
        %v1323 = vunpack.c.h.b16 %v1272
        %v1324 = vunpack.c.l.b16 %v1273
        %v1325 = vunpack.c.h.b16 %v1273
        %v1326 = vunpack.c.l.b16 %v1274
        %v1327 = vunpack.c.h.b16 %v1274
        %v1328 = vunpack.c.l.b16 %v1275
        %v1329 = vunpack.c.h.b16 %v1275
        %v1330 = vunpack.c.l.b16 %v1276
        %v1331 = vunpack.c.h.b16 %v1276
        %v1332 = vunpack.c.l.b16 %v1277
        %v1333 = vunpack.c.h.b16 %v1277
        %v1334 = vunpack.c.l.b16 %v1278
        %v1335 = vunpack.c.h.b16 %v1278
        %v1336 = vunpack.c.l.b16 %v1279
        %v1337 = vunpack.c.h.b16 %v1279
        %v1338 = vunpack.c.l.b16 %v1280
        %v1339 = vunpack.c.h.b16 %v1280
        %v1340 = vunpack.c.l.b16 %v1281
        %v1341 = vunpack.c.h.b16 %v1281
        %v1342 = vpack.c.b16 %v1312, %v1310
        %v1343 = vpack.c.b16 %v1313, %v1311
        %v1344 = vpack.c.b16 %v1316, %v1314
        %v1345 = vpack.c.b16 %v1317, %v1315
        %v1346 = vpack.c.b16 %v1320, %v1318
        %v1347 = vpack.c.b16 %v1321, %v1319
        %v1348 = vpack.c.b16 %v1324, %v1322
        %v1349 = vpack.c.b16 %v1325, %v1323
        %v1350 = vpack.c.b16 %v1328, %v1326
        %v1351 = vpack.c.b16 %v1329, %v1327
        %v1352 = vpack.c.b16 %v1332, %v1330
        %v1353 = vpack.c.b16 %v1333, %v1331
        %v1354 = vpack.c.b16 %v1336, %v1334
        %v1355 = vpack.c.b16 %v1337, %v1335
        %v1356 = vpack.c.b16 %v1340, %v1338
        %v1357 = vpack.c.b16 %v1341, %v1339
        %1374 = vmatprep.subr.bf16.mxu0 %v1343
        %1375 = vmatpush1.bf16.msra.mxu0 %v1342
        %1376 = vmatprep.subr.bf16.mxu0 %v1345
        %1377 = vmatpush1.bf16.msra.mxu0 %v1344
        %1378 = vmatprep.subr.bf16.mxu0 %v1347
        %1379 = vmatpush1.bf16.msra.mxu0 %v1346
        %1380 = vmatprep.subr.bf16.mxu0 %v1349
        %1381 = vmatpush1.bf16.msra.mxu0 %v1348
        %1382 = vmatprep.subr.bf16.mxu0 %v1351
        %1383 = vmatpush1.bf16.msra.mxu0 %v1350
        %1384 = vmatprep.subr.bf16.mxu0 %v1353
        %1385 = vmatpush1.bf16.msra.mxu0 %v1352
        %1386 = vmatprep.subr.bf16.mxu0 %v1355
        %1387 = vmatpush1.bf16.msra.mxu0 %v1354
        %1388 = vmatprep.subr.bf16.mxu0 %v1357
        %1389 = vmatpush1.bf16.msra.mxu0 %v1356
        %1390 = vmatprep.subr.bf16.mxu0 0
        %1391 = vmatpush1.bf16.msra.mxu0 0
        %1392 = vmatprep.subr.bf16.mxu0 0
        %1393 = vmatpush1.bf16.msra.mxu0 0
        %1394 = vmatprep.subr.bf16.mxu0 0
        %1395 = vmatpush1.bf16.msra.mxu0 0
        %1396 = vmatprep.subr.bf16.mxu0 0
        %1397 = vmatpush1.bf16.msra.mxu0 0
        %1398 = vmatprep.subr.bf16.mxu0 0
        %1399 = vmatpush1.bf16.msra.mxu0 0
        %1400 = vmatprep.subr.bf16.mxu0 0
        %1401 = vmatpush1.bf16.msra.mxu0 0
        %1402 = vmatprep.subr.bf16.mxu0 0
        %1403 = vmatpush1.bf16.msra.mxu0 0
        %1404 = vmatprep.subr.bf16.mxu0 0
        %1405 = vmatpush1.bf16.msra.mxu0 0
        %1406 = vmatprep.mubr.bf16.mxu0 0
        %1407 = vmatmul.mubr.bf16.gmra.mrb[0].mxu0 %v1262
        %v1408 = vpop.f32.mrb[0].mxu0
        %v1409 = vadd.f32 %v1287, %v1408
        %v1410 = vpop.f32.mrb[0].mxu0
        %v1411 = vadd.f32 %v1291, %v1410
        %v1412 = vpop.f32.mrb[0].mxu0
        %v1413 = vadd.f32 %v1287, %v1412
        %v1414 = vpop.f32.mrb[0].mxu0
        %v1415 = vadd.f32 %v1291, %v1414
        %1416 = vmatprep.mubr.bf16.mxu0 0
        %1417 = vmatmul.mubr.bf16.gmra.mrb[0].mxu0 %v1263
        %v1418 = vpop.f32.mrb[0].mxu0
        %v1419 = vadd.f32 %v1287, %v1418
        %v1420 = vpop.f32.mrb[0].mxu0
        %v1421 = vadd.f32 %v1291, %v1420
        %v1422 = vpop.f32.mrb[0].mxu0
        %v1423 = vadd.f32 %v1287, %v1422
        %v1424 = vpop.f32.mrb[0].mxu0
        %v1425 = vadd.f32 %v1291, %v1424
        %1426 = vmatprep.mubr.bf16.mxu0 0
        %1427 = vmatmul.mubr.bf16.gmra.mrb[0].mxu0 %v1264
        %v1428 = vpop.f32.mrb[0].mxu0
        %v1429 = vadd.f32 %v1287, %v1428
        %v1430 = vpop.f32.mrb[0].mxu0
        %v1431 = vadd.f32 %v1291, %v1430
        %v1432 = vpop.f32.mrb[0].mxu0
        %v1433 = vadd.f32 %v1287, %v1432
        %v1434 = vpop.f32.mrb[0].mxu0
        %v1435 = vadd.f32 %v1291, %v1434
        %1436 = vmatprep.mubr.bf16.mxu0 0
        %1437 = vmatmul.mubr.bf16.gmra.mrb[0].mxu0 %v1265
        %v1438 = vpop.f32.mrb[0].mxu0
        %v1439 = vadd.f32 %v1287, %v1438
        %v1440 = vpop.f32.mrb[0].mxu0
        %v1441 = vadd.f32 %v1291, %v1440
        %v1442 = vpop.f32.mrb[0].mxu0
        %v1443 = vadd.f32 %v1287, %v1442
        %v1444 = vpop.f32.mrb[0].mxu0
        %v1445 = vadd.f32 %v1291, %v1444
        %1446 = vdwg.mxu0
        %1447 = vst [vmem:[%s551] sm:$0xff] %v1409
        %1448 = vst [vmem:[%s551 + $0x8] sm:$0xff] %v1411
        %1449 = vst [vmem:[%s551 + $0x10] sm:$0xff] %v1413
        %1450 = vst [vmem:[%s551 + $0x18] sm:$0xff] %v1415
        %1451 = vst [vmem:[%s551 + $0x20] sm:$0xff] %v1419
        %1452 = vst [vmem:[%s551 + $0x28] sm:$0xff] %v1421
        %1453 = vst [vmem:[%s551 + $0x30] sm:$0xff] %v1423
        %1454 = vst [vmem:[%s551 + $0x38] sm:$0xff] %v1425
        %1455 = vst [vmem:[%s551 + $0x40] sm:$0xff] %v1429
        %1456 = vst [vmem:[%s551 + $0x48] sm:$0xff] %v1431
        %1457 = vst [vmem:[%s551 + $0x50] sm:$0xff] %v1433
        %1458 = vst [vmem:[%s551 + $0x58] sm:$0xff] %v1435
        %1459 = vst [vmem:[%s551 + $0x60] sm:$0xff] %v1439
        %1460 = vst [vmem:[%s551 + $0x68] sm:$0xff] %v1441
        %1461 = vst [vmem:[%s551 + $0x70] sm:$0xff] %v1443
        %1462 = vst [vmem:[%s551 + $0x78] sm:$0xff] %v1445
        %s1463 = smul.u32 %s35, 128
        %v1464 = vlaneseq
        %v1465 = vand.u32 %v1464, 127
        %v1466 = vstv %s1463
        %v1467 = vadd.s32 %v1466, %v1465
        %vm1468 = vcmp.lt.s32.totalorder %v1467, 250
        %v1469 = vsel %vm1468, 1, 0
        %vm1470 = vcmp.eq.s32.totalorder %v1469, 1
        %v1471 = vsel %vm1470, %v1409, 0.0
        %v1472 = vsel %vm1470, %v1413, 0.0
        %v1473 = vsel %vm1470, %v1419, 0.0
        %v1474 = vsel %vm1470, %v1423, 0.0
        %v1475 = vsel %vm1470, %v1429, 0.0
        %v1476 = vsel %vm1470, %v1433, 0.0
        %v1477 = vsel %vm1470, %v1439, 0.0
        %v1478 = vsel %vm1470, %v1443, 0.0
        %v1479 = vsel %vm1470, %v1411, 0.0
        %v1480 = vsel %vm1470, %v1415, 0.0
        %v1481 = vsel %vm1470, %v1421, 0.0
        %v1482 = vsel %vm1470, %v1425, 0.0
        %v1483 = vsel %vm1470, %v1431, 0.0
        %v1484 = vsel %vm1470, %v1435, 0.0
        %v1485 = vsel %vm1470, %v1441, 0.0
        %v1486 = vsel %vm1470, %v1445, 0.0
        %v1487 = vld [vmem:[%s12] sm:$0xff]
        %v1488 = vld [vmem:[%s12 + $0x8] sm:$0xff]
        %v1489 = vld [vmem:[%s12 + $0x10] sm:$0xff]
        %v1490 = vld [vmem:[%s12 + $0x18] sm:$0xff]
        %v1491 = vld [vmem:[%s12 + $0x20] sm:$0xff]
        %v1492 = vld [vmem:[%s12 + $0x28] sm:$0xff]
        %v1493 = vld [vmem:[%s12 + $0x30] sm:$0xff]
        %v1494 = vld [vmem:[%s12 + $0x38] sm:$0xff]
        %1495 = vadd.xlane.f32.xlu0 %v1471
        %v1496 = vpop.xlane.xlu0 %1495
        %1497 = vadd.xlane.f32.xlu0 %v1472
        %v1498 = vpop.xlane.xlu0 %1497
        %1499 = vadd.xlane.f32.xlu0 %v1473
        %v1500 = vpop.xlane.xlu0 %1499
        %1501 = vadd.xlane.f32.xlu0 %v1474
        %v1502 = vpop.xlane.xlu0 %1501
        %1503 = vadd.xlane.f32.xlu0 %v1475
        %v1504 = vpop.xlane.xlu0 %1503
        %1505 = vadd.xlane.f32.xlu0 %v1476
        %v1506 = vpop.xlane.xlu0 %1505
        %1507 = vadd.xlane.f32.xlu0 %v1477
        %v1508 = vpop.xlane.xlu0 %1507
        %1509 = vadd.xlane.f32.xlu0 %v1478
        %v1510 = vpop.xlane.xlu0 %1509
        %v1511 = vadd.f32 %v1487, %v1496
        %v1512 = vadd.f32 %v1488, %v1498
        %v1513 = vadd.f32 %v1489, %v1500
        %v1514 = vadd.f32 %v1490, %v1502
        %v1515 = vadd.f32 %v1491, %v1504
        %v1516 = vadd.f32 %v1492, %v1506
        %v1517 = vadd.f32 %v1493, %v1508
        %v1518 = vadd.f32 %v1494, %v1510
        %vm1519 = vcmask 7168
        %1520 = vst.msk [vmem:[%s12] sm:$0xff] %vm1519, %v1511
        %1521 = vst.msk [vmem:[%s12 + $0x8] sm:$0xff] %vm1519, %v1512
        %1522 = vst.msk [vmem:[%s12 + $0x10] sm:$0xff] %vm1519, %v1513
        %1523 = vst.msk [vmem:[%s12 + $0x18] sm:$0xff] %vm1519, %v1514
        %1524 = vst.msk [vmem:[%s12 + $0x20] sm:$0xff] %vm1519, %v1515
        %1525 = vst.msk [vmem:[%s12 + $0x28] sm:$0xff] %vm1519, %v1516
        %1526 = vst.msk [vmem:[%s12 + $0x30] sm:$0xff] %vm1519, %v1517
        %1527 = vst.msk [vmem:[%s12 + $0x38] sm:$0xff] %vm1519, %v1518
        %v1528 = vld [vmem:[%s13] sm:$0xff]
        %v1529 = vld [vmem:[%s13 + $0x8] sm:$0xff]
        %v1530 = vld [vmem:[%s13 + $0x10] sm:$0xff]
        %v1531 = vld [vmem:[%s13 + $0x18] sm:$0xff]
        %v1532 = vld [vmem:[%s13 + $0x20] sm:$0xff]
        %v1533 = vld [vmem:[%s13 + $0x28] sm:$0xff]
        %v1534 = vld [vmem:[%s13 + $0x30] sm:$0xff]
        %v1535 = vld [vmem:[%s13 + $0x38] sm:$0xff]
        %1536 = vadd.xlane.f32.xlu0 %v1479
        %v1537 = vpop.xlane.xlu0 %1536
        %1538 = vadd.xlane.f32.xlu0 %v1480
        %v1539 = vpop.xlane.xlu0 %1538
        %1540 = vadd.xlane.f32.xlu0 %v1481
        %v1541 = vpop.xlane.xlu0 %1540
        %1542 = vadd.xlane.f32.xlu0 %v1482
        %v1543 = vpop.xlane.xlu0 %1542
        %1544 = vadd.xlane.f32.xlu0 %v1483
        %v1545 = vpop.xlane.xlu0 %1544
        %1546 = vadd.xlane.f32.xlu0 %v1484
        %v1547 = vpop.xlane.xlu0 %1546
        %1548 = vadd.xlane.f32.xlu0 %v1485
        %v1549 = vpop.xlane.xlu0 %1548
        %1550 = vadd.xlane.f32.xlu0 %v1486
        %v1551 = vpop.xlane.xlu0 %1550
        %v1552 = vadd.f32 %v1528, %v1537
        %v1553 = vadd.f32 %v1529, %v1539
        %v1554 = vadd.f32 %v1530, %v1541
        %v1555 = vadd.f32 %v1531, %v1543
        %v1556 = vadd.f32 %v1532, %v1545
        %v1557 = vadd.f32 %v1533, %v1547
        %v1558 = vadd.f32 %v1534, %v1549
        %v1559 = vadd.f32 %v1535, %v1551
        %1560 = vst.msk [vmem:[%s13] sm:$0xff] %vm1519, %v1552
        %1561 = vst.msk [vmem:[%s13 + $0x8] sm:$0xff] %vm1519, %v1553
        %1562 = vst.msk [vmem:[%s13 + $0x10] sm:$0xff] %vm1519, %v1554
        %1563 = vst.msk [vmem:[%s13 + $0x18] sm:$0xff] %vm1519, %v1555
        %1564 = vst.msk [vmem:[%s13 + $0x20] sm:$0xff] %vm1519, %v1556
        %1565 = vst.msk [vmem:[%s13 + $0x28] sm:$0xff] %vm1519, %v1557
        %1566 = vst.msk [vmem:[%s13 + $0x30] sm:$0xff] %vm1519, %v1558
        %1567 = vst.msk [vmem:[%s13 + $0x38] sm:$0xff] %vm1519, %v1559
        %v1568 = vld [vmem:[%s14] sm:$0xff]
        %v1569 = vld [vmem:[%s14 + $0x8] sm:$0xff]
        %v1570 = vld [vmem:[%s14 + $0x10] sm:$0xff]
        %v1571 = vld [vmem:[%s14 + $0x18] sm:$0xff]
        %v1572 = vld [vmem:[%s14 + $0x20] sm:$0xff]
        %v1573 = vld [vmem:[%s14 + $0x28] sm:$0xff]
        %v1574 = vld [vmem:[%s14 + $0x30] sm:$0xff]
        %v1575 = vld [vmem:[%s14 + $0x38] sm:$0xff]
        %v1576 = vmul.f32 %v1471, %v1471
        %v1577 = vmul.f32 %v1472, %v1472
        %v1578 = vmul.f32 %v1473, %v1473
        %v1579 = vmul.f32 %v1474, %v1474
        %v1580 = vmul.f32 %v1475, %v1475
        %v1581 = vmul.f32 %v1476, %v1476
        %v1582 = vmul.f32 %v1477, %v1477
        %v1583 = vmul.f32 %v1478, %v1478
        %1584 = vadd.xlane.f32.xlu0 %v1576
        %v1585 = vpop.xlane.xlu0 %1584
        %1586 = vadd.xlane.f32.xlu0 %v1577
        %v1587 = vpop.xlane.xlu0 %1586
        %1588 = vadd.xlane.f32.xlu0 %v1578
        %v1589 = vpop.xlane.xlu0 %1588
        %1590 = vadd.xlane.f32.xlu0 %v1579
        %v1591 = vpop.xlane.xlu0 %1590
        %1592 = vadd.xlane.f32.xlu0 %v1580
        %v1593 = vpop.xlane.xlu0 %1592
        %1594 = vadd.xlane.f32.xlu0 %v1581
        %v1595 = vpop.xlane.xlu0 %1594
        %1596 = vadd.xlane.f32.xlu0 %v1582
        %v1597 = vpop.xlane.xlu0 %1596
        %1598 = vadd.xlane.f32.xlu0 %v1583
        %v1599 = vpop.xlane.xlu0 %1598
        %v1600 = vadd.f32 %v1568, %v1585
        %v1601 = vadd.f32 %v1569, %v1587
        %v1602 = vadd.f32 %v1570, %v1589
        %v1603 = vadd.f32 %v1571, %v1591
        %v1604 = vadd.f32 %v1572, %v1593
        %v1605 = vadd.f32 %v1573, %v1595
        %v1606 = vadd.f32 %v1574, %v1597
        %v1607 = vadd.f32 %v1575, %v1599
        %1608 = vst.msk [vmem:[%s14] sm:$0xff] %vm1519, %v1600
        %1609 = vst.msk [vmem:[%s14 + $0x8] sm:$0xff] %vm1519, %v1601
        %1610 = vst.msk [vmem:[%s14 + $0x10] sm:$0xff] %vm1519, %v1602
        %1611 = vst.msk [vmem:[%s14 + $0x18] sm:$0xff] %vm1519, %v1603
        %1612 = vst.msk [vmem:[%s14 + $0x20] sm:$0xff] %vm1519, %v1604
        %1613 = vst.msk [vmem:[%s14 + $0x28] sm:$0xff] %vm1519, %v1605
        %1614 = vst.msk [vmem:[%s14 + $0x30] sm:$0xff] %vm1519, %v1606
        %1615 = vst.msk [vmem:[%s14 + $0x38] sm:$0xff] %vm1519, %v1607
        %v1616 = vld [vmem:[%s15] sm:$0xff]
        %v1617 = vld [vmem:[%s15 + $0x8] sm:$0xff]
        %v1618 = vld [vmem:[%s15 + $0x10] sm:$0xff]
        %v1619 = vld [vmem:[%s15 + $0x18] sm:$0xff]
        %v1620 = vld [vmem:[%s15 + $0x20] sm:$0xff]
        %v1621 = vld [vmem:[%s15 + $0x28] sm:$0xff]
        %v1622 = vld [vmem:[%s15 + $0x30] sm:$0xff]
        %v1623 = vld [vmem:[%s15 + $0x38] sm:$0xff]
        %v1624 = vmul.f32 %v1479, %v1479
        %v1625 = vmul.f32 %v1480, %v1480
        %v1626 = vmul.f32 %v1481, %v1481
        %v1627 = vmul.f32 %v1482, %v1482
        %v1628 = vmul.f32 %v1483, %v1483
        %v1629 = vmul.f32 %v1484, %v1484
        %v1630 = vmul.f32 %v1485, %v1485
        %v1631 = vmul.f32 %v1486, %v1486
        %1632 = vadd.xlane.f32.xlu0 %v1624
        %v1633 = vpop.xlane.xlu0 %1632
        %1634 = vadd.xlane.f32.xlu0 %v1625
        %v1635 = vpop.xlane.xlu0 %1634
        %1636 = vadd.xlane.f32.xlu0 %v1626
        %v1637 = vpop.xlane.xlu0 %1636
        %1638 = vadd.xlane.f32.xlu0 %v1627
        %v1639 = vpop.xlane.xlu0 %1638
        %1640 = vadd.xlane.f32.xlu0 %v1628
        %v1641 = vpop.xlane.xlu0 %1640
        %1642 = vadd.xlane.f32.xlu0 %v1629
        %v1643 = vpop.xlane.xlu0 %1642
        %1644 = vadd.xlane.f32.xlu0 %v1630
        %v1645 = vpop.xlane.xlu0 %1644
        %1646 = vadd.xlane.f32.xlu0 %v1631
        %v1647 = vpop.xlane.xlu0 %1646
        %v1648 = vadd.f32 %v1616, %v1633
        %v1649 = vadd.f32 %v1617, %v1635
        %v1650 = vadd.f32 %v1618, %v1637
        %v1651 = vadd.f32 %v1619, %v1639
        %v1652 = vadd.f32 %v1620, %v1641
        %v1653 = vadd.f32 %v1621, %v1643
        %v1654 = vadd.f32 %v1622, %v1645
        %v1655 = vadd.f32 %v1623, %v1647
        %1656 = vst.msk [vmem:[%s15] sm:$0xff] %vm1519, %v1648
        %1657 = vst.msk [vmem:[%s15 + $0x8] sm:$0xff] %vm1519, %v1649
        %1658 = vst.msk [vmem:[%s15 + $0x10] sm:$0xff] %vm1519, %v1650
        %1659 = vst.msk [vmem:[%s15 + $0x18] sm:$0xff] %vm1519, %v1651
        %1660 = vst.msk [vmem:[%s15 + $0x20] sm:$0xff] %vm1519, %v1652
        %1661 = vst.msk [vmem:[%s15 + $0x28] sm:$0xff] %vm1519, %v1653
        %1662 = vst.msk [vmem:[%s15 + $0x30] sm:$0xff] %vm1519, %v1654
        %1663 = vst.msk [vmem:[%s15 + $0x38] sm:$0xff] %vm1519, %v1655
        %s1664 = sand.u32 %s284, 1
        %s1665 = scalar_lea.sflag [#allocation5], %s1664
        %s1666 = sand.u32 %s284, 1
        %s1667 = smul.addr %s1666, 128
        %s1668 = scalar_lea.vmem [#allocation11], %s1667
        // Predicated region
        $region85: #{tpu_custom_call.1} parent=63 // pred_check
          %p1669 = pneg %p294
        $region86: #{tpu_custom_call.1} parent=63 // pred_check_branch
          %1671 = sbr.rel (%p1669) target = $region88
        $region87: #{tpu_custom_call.1} parent=63 // pred_region
          %s1672 = smul.u32 2, %s35
          %s1674 = ssub.s32 2048, 2048
          %1675 = vsyncadd %s1665, %s1674
          %s1676 = smul.addr %s1672, 128
          %s1677 = scalar_lea.hbm %s11, %s1676
          %s1678 = sshll.u32 %s1668, 4
          %s1679 = int_to_ptr.vmem [resolvable:$true] %s1678
          %1684 = dma.vmem_to_hbm [thread:$0]  %s1679, 2048, %s1677, %s1665, 256, 512, 16
        $region88: #{tpu_custom_call.1} parent=63 // pred_fallthru
          _
        // Predicated region
        $region89: #{tpu_custom_call.1} parent=63 // pred_check
          %p1685 = pneg %p315
        $region90: #{tpu_custom_call.1} parent=63 // pred_check_branch
          %1687 = sbr.rel (%p1685) target = $region92
        $region91: #{tpu_custom_call.1} parent=63 // pred_region
          _
        $region92: #{tpu_custom_call.1} parent=63 // pred_fallthru
          _
        // Predicated region
        $region93: #{tpu_custom_call.1} parent=63 // pred_check
          %p1688 = pneg %p336
        $region94: #{tpu_custom_call.1} parent=63 // pred_check_branch
          %1690 = sbr.rel (%p1688) target = $region96
        $region95: #{tpu_custom_call.1} parent=63 // pred_region
          _
        $region96: #{tpu_custom_call.1} parent=63 // pred_fallthru
          _
        // Predicated region
        $region97: #{tpu_custom_call.1} parent=63 // pred_check
          %p1691 = pneg %p357
        $region98: #{tpu_custom_call.1} parent=63 // pred_check_branch
          %1693 = sbr.rel (%p1691) target = $region100
        $region99: #{tpu_custom_call.1} parent=63 // pred_region
          _
        $region100: #{tpu_custom_call.1} parent=63 // pred_fallthru
          _
        // Predicated region
        $region101: #{tpu_custom_call.1} parent=63 // pred_check
          %p1694 = pneg %p378
        $region102: #{tpu_custom_call.1} parent=63 // pred_check_branch
          %1696 = sbr.rel (%p1694) target = $region104
        $region103: #{tpu_custom_call.1} parent=63 // pred_region
          _
        $region104: #{tpu_custom_call.1} parent=63 // pred_fallthru
          _
        // Predicated region
        $region105: #{tpu_custom_call.1} parent=63 // pred_check
          %p1697 = pneg %p315
        $region106: #{tpu_custom_call.1} parent=63 // pred_check_branch
          %1699 = sbr.rel (%p1697) target = $region108
        $region107: #{tpu_custom_call.1} parent=63 // pred_region
          _
        $region108: #{tpu_custom_call.1} parent=63 // pred_fallthru
          _
        // Predicated region
        $region109: #{tpu_custom_call.1} parent=63 // pred_check
          %p1700 = pneg %p336
        $region110: #{tpu_custom_call.1} parent=63 // pred_check_branch
          %1702 = sbr.rel (%p1700) target = $region112
        $region111: #{tpu_custom_call.1} parent=63 // pred_region
          _
        $region112: #{tpu_custom_call.1} parent=63 // pred_fallthru
          _
        // Predicated region
        $region113: #{tpu_custom_call.1} parent=63 // pred_check
          %p1703 = pneg %p357
        $region114: #{tpu_custom_call.1} parent=63 // pred_check_branch
          %1705 = sbr.rel (%p1703) target = $region116
        $region115: #{tpu_custom_call.1} parent=63 // pred_region
          _
        $region116: #{tpu_custom_call.1} parent=63 // pred_fallthru
          _
        // Predicated region
        $region117: #{tpu_custom_call.1} parent=63 // pred_check
          %p1706 = pneg %p378
        $region118: #{tpu_custom_call.1} parent=63 // pred_check_branch
          %1708 = sbr.rel (%p1706) target = $region120
        $region119: #{tpu_custom_call.1} parent=63 // pred_region
          _
        $region120: #{tpu_custom_call.1} parent=63 // pred_fallthru
          _
      $region64: #{tpu_custom_call.1} parent=5 // pred_fallthru
        _
      %p1709 = scmp.le.s32.totalorder 2, %s30
      // Predicated region
      $region121: #{tpu_custom_call.1} parent=5 // pred_check
        %p1710 = pneg %p1709
      $region122: #{tpu_custom_call.1} parent=5 // pred_check_branch
        %1712 = sbr.rel (%p1710) target = $region124
      $region123: #{tpu_custom_call.1} parent=5 // pred_region
        %s1713 = ssub.s32 %s30, 2
        // Predicated region
        $region125: #{tpu_custom_call.1} parent=123 // pred_check
          %p1714 = pneg %p300
        $region126: #{tpu_custom_call.1} parent=123 // pred_check_branch
          %1716 = sbr.rel (%p1714) target = $region128
        $region127: #{tpu_custom_call.1} parent=123 // pred_region
          %s1717 = sand.u32 %s285, 1
          %s1718 = scalar_lea.sflag [#allocation5], %s1717
          %s1719 = sand.u32 %s285, 1
          %s1720 = smul.addr %s1719, 128
          %s1721 = scalar_lea.vmem [#allocation11], %s1720
          %1722 = dma.done %s1718, 2048
        $region128: #{tpu_custom_call.1} parent=123 // pred_fallthru
          _
      $region124: #{tpu_custom_call.1} parent=5 // pred_fallthru
        _
    $region6: #{tpu_custom_call.1} parent=1 // loop_footer
      %s34 = sadd.s32 1, %s30
    $region7: #{tpu_custom_call.1} parent=1 // loop_footer_branch
      %29 = sbr.rel target = $region3
    $region8: #{tpu_custom_call.1} parent=1 // loop_exit
      _
    %1723 = vsyncpa [#allocation4], 1
    %s1724 = scalar_lea.sflag [#allocation4], 1
    %1725 = vsyncpa %s1724, 1
    %1726 = vsyncpa [#allocation7], 1
    %1727 = vsyncpa [#allocation10], 1
    %s1728 = scalar_lea.sflag [#allocation10], 1
    %1729 = vsyncpa %s1728, 1
    %1730 = vsyncpa [#allocation5], 1
    %s1731 = scalar_lea.sflag [#allocation5], 1
    %1732 = vsyncpa %s1731, 1

</llo_original>
